<compile_context>
chip_gen: v6e
topology: v6e:2x2x1
jax: 0.10.0
libtpu: 0.0.40
codegen_flags: <defaults>
</compile_context>

<pallas_src>
import functools

import jax
import jax.numpy as jnp
from jax.experimental import pallas as pl
from jax.experimental.pallas import tpu as pltpu

HP = 128          # padded hidden width (lane-dense)
OUT_LANES = 128   # lane-dense output slab width


def _round_up(n, m):
    return ((n + m - 1) // m) * m


def actor_critic_kernel(x_ref, w1_ref, b1_ref, wh1_ref, bh1_ref,
                        wh2_ref, bh2_ref, out_ref, *, n_actions):
    # Compute dtype follows the packed-weight dtype (f32, or bf16 on v6e/v7x).
    cdt = w1_ref.dtype
    x = x_ref[...].astype(cdt)                                       # [TB, obs]

    # shared trunk: Linear + Tanh (padded lanes of shared are tanh(0)=0)
    s_pre = (jnp.dot(x, w1_ref[...], preferred_element_type=jnp.float32)
             + b1_ref[...])                                          # [TB,128] f32
    shared = jnp.tanh(s_pre.astype(cdt))                             # [TB,128]

    # fused head first layers: ONE [128,128] matmul
    #   actor hidden in lanes 0..H-1, critic hidden in lanes H..2H-1
    h_pre = (jnp.dot(shared, wh1_ref[...], preferred_element_type=jnp.float32)
             + bh1_ref[...])                                         # [TB,128] f32
    h = jnp.tanh(h_pre.astype(cdt))                                  # [TB,128]

    # fused head second layers: ONE block-diagonal [128,128] matmul
    #   lanes 0..A-1 = actor logits, lane A = critic value, rest 0
    z = (jnp.dot(h, wh2_ref[...], preferred_element_type=jnp.float32)
         + bh2_ref[...])                                             # [TB,128] f32

    # softmax over valid logit lanes (padded lanes -> -1e30; exp underflows to 0)
    lane = jax.lax.broadcasted_iota(jnp.int32, z.shape, 1)
    is_logit = lane < n_actions
    logits = jnp.where(is_logit, z, jnp.float32(-1e30))
    m = jnp.max(logits, axis=-1, keepdims=True)
    e = jnp.exp(logits - m)
    denom = jnp.sum(e, axis=-1, keepdims=True)
    probs = e / denom                                  # exact divide (matches ref)

    # single lane-dense store: probs in logit lanes, critic value in lane A
    out_ref[...] = jnp.where(lane == n_actions, z, probs)


def pack_params(p, obs_dim, hidden, n_actions, param_dtype=jnp.float32):
    """Zero-pad / fuse weights into lane-dense layouts.

    Call ONCE per parameter update (not per forward) and reuse the result.
    Weights are cast to `param_dtype` (use bf16 on v6e/v7x); biases stay f32
    because they are added to f32 MXU accumulations.
    """
    assert 2 * hidden <= HP, "fused single-block head packing needs 2*hidden <= 128"
    assert n_actions + 1 <= OUT_LANES

    f32 = jnp.float32
    w1p = jnp.zeros((obs_dim, HP), f32).at[:, :hidden].set(p["w1"])
    b1p = jnp.zeros((1, HP), f32).at[:, :hidden].set(p["b1"])

    wh1 = (jnp.zeros((HP, HP), f32)
           .at[:hidden, :hidden].set(p["wa1"])
           .at[:hidden, hidden:2 * hidden].set(p["wc1"]))
    bh1 = (jnp.zeros((1, HP), f32)
           .at[:, :hidden].set(p["ba1"])
           .at[:, hidden:2 * hidden].set(p["bc1"]))

    wh2 = (jnp.zeros((HP, OUT_LANES), f32)
           .at[:hidden, :n_actions].set(p["wa2"])
           .at[hidden:2 * hidden, n_actions:n_actions + 1].set(p["wc2"]))
    bh2 = (jnp.zeros((1, OUT_LANES), f32)
           .at[:, :n_actions].set(p["ba2"])
           .at[:, n_actions:n_actions + 1].set(p["bc2"]))

    return (w1p.astype(param_dtype), b1p,
            wh1.astype(param_dtype), bh1,
            wh2.astype(param_dtype), bh2)


def actor_critic_forward(x, packed, *, n_actions, tile_b=512,
                         vmem_limit_bytes=None):
    """Run the fused forward pass. `packed` comes from pack_params()."""
    w1p, b1p, wh1, bh1, wh2, bh2 = packed
    B, obs_dim = x.shape

    # batch tile: big (amortizes ~0.35us/step grid overhead), multiple of 8
    tile_b = _round_up(min(tile_b, _round_up(B, 8)), 8)
    b_pad = _round_up(B, tile_b)
    if b_pad != B:
        x = jnp.pad(x, ((0, b_pad - B), (0, 0)))

    cp_kwargs = dict(dimension_semantics=("parallel",))
    # For very large tile_b (>=~2k rows) on v5e, pass vmem_limit_bytes explicitly
    # (default scoped limit there is 16 MiB). Not needed at the default tiles.
    if vmem_limit_bytes is not None:
        cp_kwargs["vmem_limit_bytes"] = vmem_limit_bytes

    kernel = functools.partial(actor_critic_kernel, n_actions=n_actions)
    out = pl.pallas_call(
        kernel,
        out_shape=jax.ShapeDtypeStruct((b_pad, OUT_LANES), jnp.float32),
        grid=(b_pad // tile_b,),
        in_specs=[
            pl.BlockSpec((tile_b, obs_dim), lambda i: (i, 0)),       # x (batch tiled)
            pl.BlockSpec((obs_dim, HP), lambda i: (0, 0)),           # W1 (resident)
            pl.BlockSpec((1, HP), lambda i: (0, 0)),                 # b1
            pl.BlockSpec((HP, HP), lambda i: (0, 0)),                # fused head-1 W
            pl.BlockSpec((1, HP), lambda i: (0, 0)),                 # fused head-1 b
            pl.BlockSpec((HP, OUT_LANES), lambda i: (0, 0)),         # fused head-2 W
            pl.BlockSpec((1, OUT_LANES), lambda i: (0, 0)),          # fused head-2 b
        ],
        out_specs=pl.BlockSpec((tile_b, OUT_LANES), lambda i: (i, 0)),
        compiler_params=pltpu.CompilerParams(**cp_kwargs),
        # TODO(synk): on v7x, consider pltpu.CORE_PARALLEL on the batch axis and
        # keep the grid length >= 2 to use both TensorCores.
    )(x, w1p, b1p, wh1, bh1, wh2, bh2)

    actor = out[:B, :n_actions]
    critic = out[:B, n_actions]                                      # squeeze(-1)
    return actor, critic


def init_params(key, obs_dim, hidden, n_actions):
    """Deterministic PyTorch-style Linear init (uniform +/- 1/sqrt(fan_in))."""
    def linear(k, fan_in, fan_out):
        kw, kb = jax.random.split(k)
        bound = 1.0 / jnp.sqrt(fan_in)
        w = jax.random.uniform(kw, (fan_in, fan_out), jnp.float32, -bound, bound)
        b = jax.random.uniform(kb, (1, fan_out), jnp.float32, -bound, bound)
        return w, b

    k1, k2, k3, k4, k5 = jax.random.split(key, 5)
    w1, b1 = linear(k1, obs_dim, hidden)
    wa1, ba1 = linear(k2, hidden, hidden)
    wa2, ba2 = linear(k3, hidden, n_actions)
    wc1, bc1 = linear(k4, hidden, hidden)
    wc2, bc2 = linear(k5, hidden, 1)
    return dict(w1=w1, b1=b1, wa1=wa1, ba1=ba1, wa2=wa2, ba2=ba2,
                wc1=wc1, bc1=bc1, wc2=wc2, bc2=bc2)


def reference_forward(x, p):
    shared = jnp.tanh(x @ p["w1"] + p["b1"])
    ha = jnp.tanh(shared @ p["wa1"] + p["ba1"])
    actor = jax.nn.softmax(ha @ p["wa2"] + p["ba2"], axis=-1)
    hc = jnp.tanh(shared @ p["wc1"] + p["bc1"])
    critic = (hc @ p["wc2"] + p["bc2"]).squeeze(-1)
    return actor, critic


if __name__ == "__main__":
    OBS_DIM = 8
    HIDDEN_SIZE = 32   # corresponds to args.hidden
    N_ACTIONS = 4
    BATCH = 1024       # exercises a 2-step "parallel" grid at tile_b=512

    key = jax.random.PRNGKey(0)
    kx, kp = jax.random.split(key)
    x = jax.random.normal(kx, (BATCH, OBS_DIM), jnp.float32)
    params = init_params(kp, OBS_DIM, HIDDEN_SIZE, N_ACTIONS)
    actor_ref, critic_ref = reference_forward(x, params)

    # ---- f32 path (all chips; exact-precision check) ----
    packed_f32 = pack_params(params, OBS_DIM, HIDDEN_SIZE, N_ACTIONS,
                             param_dtype=jnp.float32)   # pack once per update
    actor, critic = actor_critic_forward(
        x, packed_f32, n_actions=N_ACTIONS, tile_b=512)
    jax.block_until_ready((actor, critic))

    assert actor.shape == (BATCH, N_ACTIONS)
    assert critic.shape == (BATCH,)
    assert jnp.allclose(actor, actor_ref, atol=1e-4, rtol=1e-4)
    assert jnp.allclose(critic, critic_ref, atol=1e-4)
    assert jnp.allclose(jnp.sum(actor, axis=-1), 1.0, atol=1e-5)

    # ---- bf16 matmul + tanh path (perf path for v6e/v7x; looser tolerance) ----
    packed_bf16 = pack_params(params, OBS_DIM, HIDDEN_SIZE, N_ACTIONS,
                              param_dtype=jnp.bfloat16)
    actor_bf, critic_bf = actor_critic_forward(
        x, packed_bf16, n_actions=N_ACTIONS, tile_b=512)
    jax.block_until_ready((actor_bf, critic_bf))
    assert jnp.allclose(actor_bf, actor_ref, atol=5e-2)
    assert jnp.allclose(critic_bf, critic_ref, atol=5e-2)
    assert jnp.allclose(jnp.sum(actor_bf, axis=-1), 1.0, atol=1e-5)

    print("KERNEL_OK")
</pallas_src>

<mosaic_0001>
module attributes {stable_mosaic.version = 11 : i64} {
  func.func @actor_critic_kernel(%arg0: i32, %arg1: memref<512x8xf32, #tpu.memory_space<vmem>>, %arg2: memref<8x128xf32, #tpu.memory_space<vmem>>, %arg3: memref<1x128xf32, #tpu.memory_space<vmem>>, %arg4: memref<128x128xf32, #tpu.memory_space<vmem>>, %arg5: memref<1x128xf32, #tpu.memory_space<vmem>>, %arg6: memref<128x128xf32, #tpu.memory_space<vmem>>, %arg7: memref<1x128xf32, #tpu.memory_space<vmem>>, %arg8: memref<512x128xf32, #tpu.memory_space<vmem>>) attributes {dimension_semantics = [#tpu.dimension_semantics<parallel>], iteration_bounds = array<i64: 2>, scalar_prefetch = 0 : i64, scratch_operands = 0 : i64, tpu.core_type = #tpu.core_type<tc>, window_params = [{transform_indices = @transform_0, window_bounds = array<i64: 512, 8>}, {pipeline_mode = #tpu.pipeline_mode<synchronous>, transform_indices = @transform_1, window_bounds = array<i64: 8, 128>}, {pipeline_mode = #tpu.pipeline_mode<synchronous>, transform_indices = @transform_2, window_bounds = array<i64: 1, 128>}, {pipeline_mode = #tpu.pipeline_mode<synchronous>, transform_indices = @transform_3, window_bounds = array<i64: 128, 128>}, {pipeline_mode = #tpu.pipeline_mode<synchronous>, transform_indices = @transform_4, window_bounds = array<i64: 1, 128>}, {pipeline_mode = #tpu.pipeline_mode<synchronous>, transform_indices = @transform_5, window_bounds = array<i64: 128, 128>}, {pipeline_mode = #tpu.pipeline_mode<synchronous>, transform_indices = @transform_6, window_bounds = array<i64: 1, 128>}, {transform_indices = @transform_7, window_bounds = array<i64: 512, 128>}]} {
    %c0 = arith.constant 0 : index
    %c0_0 = arith.constant 0 : index
    %0 = vector.load %arg1[%c0, %c0_0] : memref<512x8xf32, #tpu.memory_space<vmem>>, vector<512x8xf32>
    %c0_1 = arith.constant 0 : index
    %c0_2 = arith.constant 0 : index
    %1 = vector.load %arg2[%c0_1, %c0_2] : memref<8x128xf32, #tpu.memory_space<vmem>>, vector<8x128xf32>
    %cst = arith.constant dense<0.000000e+00> : vector<512x128xf32>
    %2 = tpu.matmul %0, %1, %cst {dimension_numbers = #tpu.dot_dimension_numbers<[1], [0], [0], [1], [0, 0, 1, 1], [], []>} : vector<512x8xf32>, vector<8x128xf32>, vector<512x128xf32> -> vector<512x128xf32>
    %c0_3 = arith.constant 0 : index
    %c0_4 = arith.constant 0 : index
    %3 = vector.load %arg3[%c0_3, %c0_4] : memref<1x128xf32, #tpu.memory_space<vmem>>, vector<1x128xf32>
    %4 = vector.broadcast %3 : vector<1x128xf32> to vector<512x128xf32>
    %5 = arith.addf %2, %4 : vector<512x128xf32>
    %6 = math.tanh %5 : vector<512x128xf32>
    %c0_5 = arith.constant 0 : index
    %c0_6 = arith.constant 0 : index
    %7 = vector.load %arg4[%c0_5, %c0_6] : memref<128x128xf32, #tpu.memory_space<vmem>>, vector<128x128xf32>
    %cst_7 = arith.constant dense<0.000000e+00> : vector<512x128xf32>
    %8 = tpu.matmul %6, %7, %cst_7 {dimension_numbers = #tpu.dot_dimension_numbers<[1], [0], [0], [1], [0, 0, 1, 1], [], []>} : vector<512x128xf32>, vector<128x128xf32>, vector<512x128xf32> -> vector<512x128xf32>
    %c0_8 = arith.constant 0 : index
    %c0_9 = arith.constant 0 : index
    %9 = vector.load %arg5[%c0_8, %c0_9] : memref<1x128xf32, #tpu.memory_space<vmem>>, vector<1x128xf32>
    %10 = vector.broadcast %9 : vector<1x128xf32> to vector<512x128xf32>
    %11 = arith.addf %8, %10 : vector<512x128xf32>
    %12 = math.tanh %11 : vector<512x128xf32>
    %c0_10 = arith.constant 0 : index
    %c0_11 = arith.constant 0 : index
    %13 = vector.load %arg6[%c0_10, %c0_11] : memref<128x128xf32, #tpu.memory_space<vmem>>, vector<128x128xf32>
    %cst_12 = arith.constant dense<0.000000e+00> : vector<512x128xf32>
    %14 = tpu.matmul %12, %13, %cst_12 {dimension_numbers = #tpu.dot_dimension_numbers<[1], [0], [0], [1], [0, 0, 1, 1], [], []>} : vector<512x128xf32>, vector<128x128xf32>, vector<512x128xf32> -> vector<512x128xf32>
    %c0_13 = arith.constant 0 : index
    %c0_14 = arith.constant 0 : index
    %15 = vector.load %arg7[%c0_13, %c0_14] : memref<1x128xf32, #tpu.memory_space<vmem>>, vector<1x128xf32>
    %16 = vector.broadcast %15 : vector<1x128xf32> to vector<512x128xf32>
    %17 = arith.addf %14, %16 : vector<512x128xf32>
    %18 = tpu.iota {dimensions = array<i32: 1>} : vector<512x128xi32>
    %c4_i32 = arith.constant 4 : i32
    %19 = vector.broadcast %c4_i32 : i32 to vector<512x128xi32>
    %20 = arith.cmpi slt, %18, %19 : vector<512x128xi32>
    %cst_15 = arith.constant -1.000000e+30 : f32
    %21 = vector.broadcast %cst_15 : f32 to vector<512x128xf32>
    %22 = arith.select %20, %17, %21 : vector<512x128xi1>, vector<512x128xf32>
    %cst_16 = arith.constant dense<0xFF800000> : vector<512xf32>
    %23 = vector.multi_reduction <maximumf>, %22, %cst_16 [1] : vector<512x128xf32> to vector<512xf32>
    %24 = vector.shape_cast %23 : vector<512xf32> to vector<512x1xf32>
    %25 = vector.broadcast %24 : vector<512x1xf32> to vector<512x128xf32>
    %26 = arith.subf %22, %25 : vector<512x128xf32>
    %27 = math.exp %26 : vector<512x128xf32>
    %cst_17 = arith.constant dense<0.000000e+00> : vector<512xf32>
    %28 = vector.multi_reduction <add>, %27, %cst_17 [1] : vector<512x128xf32> to vector<512xf32>
    %29 = vector.shape_cast %28 : vector<512xf32> to vector<512x1xf32>
    %30 = vector.broadcast %29 : vector<512x1xf32> to vector<512x128xf32>
    %31 = arith.divf %27, %30 : vector<512x128xf32>
    %c4_i32_18 = arith.constant 4 : i32
    %32 = vector.broadcast %c4_i32_18 : i32 to vector<512x128xi32>
    %33 = arith.cmpi eq, %18, %32 : vector<512x128xi32>
    %34 = arith.select %33, %17, %31 : vector<512x128xi1>, vector<512x128xf32>
    %c0_19 = arith.constant 0 : index
    %c0_20 = arith.constant 0 : index
    %35 = vector.load %arg8[%c0_19, %c0_20] : memref<512x128xf32, #tpu.memory_space<vmem>>, vector<512x128xf32>
    tpu.vector_store %arg8[%c0_19, %c0_20], %34 {strides = array<i32>} : memref<512x128xf32, #tpu.memory_space<vmem>>, vector<512x128xf32>,
    return
  }
  func.func @transform_0(%arg0: i32) -> (i32, i32) {
    %c0_i32 = arith.constant 0 : i32
    %c0_i32_0 = arith.constant 0 : i32
    return %arg0, %c0_i32 : i32, i32
  }
  func.func @transform_1(%arg0: i32) -> (i32, i32) {
    %c0_i32 = arith.constant 0 : i32
    %c0_i32_0 = arith.constant 0 : i32
    %c0_i32_1 = arith.constant 0 : i32
    return %c0_i32, %c0_i32_0 : i32, i32
  }
  func.func @transform_2(%arg0: i32) -> (i32, i32) {
    %c0_i32 = arith.constant 0 : i32
    %c0_i32_0 = arith.constant 0 : i32
    %c0_i32_1 = arith.constant 0 : i32
    return %c0_i32, %c0_i32_0 : i32, i32
  }
  func.func @transform_3(%arg0: i32) -> (i32, i32) {
    %c0_i32 = arith.constant 0 : i32
    %c0_i32_0 = arith.constant 0 : i32
    %c0_i32_1 = arith.constant 0 : i32
    return %c0_i32, %c0_i32_0 : i32, i32
  }
  func.func @transform_4(%arg0: i32) -> (i32, i32) {
    %c0_i32 = arith.constant 0 : i32
    %c0_i32_0 = arith.constant 0 : i32
    %c0_i32_1 = arith.constant 0 : i32
    return %c0_i32, %c0_i32_0 : i32, i32
  }
  func.func @transform_5(%arg0: i32) -> (i32, i32) {
    %c0_i32 = arith.constant 0 : i32
    %c0_i32_0 = arith.constant 0 : i32
    %c0_i32_1 = arith.constant 0 : i32
    return %c0_i32, %c0_i32_0 : i32, i32
  }
  func.func @transform_6(%arg0: i32) -> (i32, i32) {
    %c0_i32 = arith.constant 0 : i32
    %c0_i32_0 = arith.constant 0 : i32
    %c0_i32_1 = arith.constant 0 : i32
    return %c0_i32, %c0_i32_0 : i32, i32
  }
  func.func @transform_7(%arg0: i32) -> (i32, i32) {
    %c0_i32 = arith.constant 0 : i32
    %c0_i32_0 = arith.constant 0 : i32
    return %arg0, %c0_i32 : i32, i32
  }
}

</mosaic_0001>

<llo_original>
// kernel: tpu_custom_call.1
$region0: #{tpu_custom_call.1}
  #allocation0 [shape = 'u32[]', space=smem, size = 0x4, offset = 0x4, fixed_abs, tag = 'smem constant byte address 0x4 - core index']
  #allocation1 [shape = 'u32[144,128]{1,0:T(1,128)}', space=vmem, size = 0x12000, scoped, tag = 'internal scratch']
  %s0 = inlined_call_operand.vmem [shape: f32[1024,8], index: 0, kind: input, shape index: {}]
  %s1 = inlined_call_operand.vmem [shape: f32[8,128], index: 1, kind: input, shape index: {}]
  %s2 = inlined_call_operand.vmem [shape: f32[1,128], index: 2, kind: input, shape index: {}]
  %s3 = inlined_call_operand.vmem [shape: f32[128,128], index: 3, kind: input, shape index: {}]
  %s4 = inlined_call_operand.vmem [shape: f32[1,128], index: 4, kind: input, shape index: {}]
  %s5 = inlined_call_operand.vmem [shape: f32[128,128], index: 5, kind: input, shape index: {}]
  %s6 = inlined_call_operand.vmem [shape: f32[1,128], index: 6, kind: input, shape index: {}]
  %s7 = inlined_call_operand.hbm [shape: f32[1024,128], index: 7, kind: output, shape index: {}]
  %s8 = sld [smem:[#allocation0]]
  $region61: #{tpu_custom_call.1} parent=0
    _
  %s10 = ssub.s32 1, %s8
  %s11 = scalar_select 0, %s10, %s8
  $region1: #{tpu_custom_call.1} parent=0
    #allocation2 [shape = 'u8[524288]{0}', space=vmem, size = 0x80000, scoped, tag = 'output window, operand 0']
    #allocation3 [shape = 's32[2]{0}', space=sflag, size = 0x8, scoped, tag = 'scoped memory for tpu_custom_call.1']
    %12 = vsyncpa [#allocation3], 0
    %s13 = scalar_lea.sflag [#allocation3], 1
    %14 = vsyncpa %s13, 0
    loop: start=0, step=1, limit=4
    $region2: #{tpu_custom_call.1} parent=1 // loop_pre_header
      _
    $region3: #{tpu_custom_call.1} parent=1 // loop_header
      %s16 = sphi 0, %s20
      %p17 = scmp.ge.s32.totalorder %s16, 4
      %s26 = sphi 0, %s28
      %s29 = sphi 0, %s26
      %s30 = sphi 0, %s29
      %s46 = sphi 0, %s30
      %s50 = sphi 0, %s50
      %s52 = sphi 0, %s50
      %s53 = sphi 0, %s52
      %s67 = sphi 0, %s53
      %s71 = sphi 0, %s71
      %s73 = sphi 0, %s71
      %s74 = sphi 0, %s73
      %s88 = sphi 0, %s74
      %s92 = sphi 0, %s92
      %s94 = sphi 0, %s92
      %s95 = sphi 0, %s94
      %s109 = sphi 0, %s95
      %s113 = sphi 0, %s113
      %s115 = sphi 0, %s113
      %s116 = sphi 0, %s115
      %s130 = sphi 0, %s116
      %s134 = sphi 0, %s134
      %s136 = sphi 0, %s134
      %s137 = sphi 0, %s136
      %s151 = sphi 0, %s137
      %s155 = sphi 0, %s155
      %s157 = sphi 0, %s155
      %s158 = sphi 0, %s157
      %s172 = sphi 0, %s158
      %s178 = sphi 0, %s180
      %s181 = sphi 0, %s178
      %s182 = sphi 0, %s181
      %s198 = sphi 0, %s182
    $region4: #{tpu_custom_call.1} parent=1 // loop_header_branch
      %19 = sbr.rel (%p17) target = $region8
    $region5: #{tpu_custom_call.1} parent=1 // loop_body
      %s21 = ssub.s32 %s16, 1
      %s22 = ssub.s32 %s16, 2
      %s23 = sadd.s32 %s16, 1
      %s24 = ssub.s32 %s16, %s23
      %p25 = scmp.eq.s32.totalorder %s24, 0
      %s27 = sadd.s32 %s26, 1
      %s28 = scalar_select %p25, %s26, %s27
      %p31 = pneg %p25
      %p32 = scmp.eq.s32.totalorder %s16, 1
      %p33 = por %p31, %p32
      %p34 = scmp.ne.s32.totalorder %s26, %s29
      %p35 = scmp.eq.s32.totalorder %s16, 0
      %p36 = por %p34, %p35
      %p37 = scmp.ne.s32.totalorder %s26, %s29
      %p38 = scmp.eq.s32.totalorder %s21, 1
      %p39 = por %p37, %p38
      %p40 = scmp.ne.s32.totalorder %s29, %s30
      %p41 = scmp.eq.s32.totalorder %s21, 0
      %p42 = por %p40, %p41
      %p43 = scmp.ne.s32.totalorder %s29, %s30
      %p44 = scmp.eq.s32.totalorder %s22, 1
      %p45 = por %p43, %p44
      %p47 = scmp.ne.s32.totalorder %s30, %s46
      %p48 = scmp.eq.s32.totalorder %s22, 0
      %p49 = por %p47, %p48
      %s51 = sadd.s32 %s50, 1
      %p54 = scmp.eq.s32.totalorder %s16, 1
      %p55 = scmp.ne.s32.totalorder %s50, %s52
      %p56 = scmp.eq.s32.totalorder %s16, 0
      %p57 = por %p55, %p56
      %p58 = scmp.ne.s32.totalorder %s50, %s52
      %p59 = scmp.eq.s32.totalorder %s21, 1
      %p60 = por %p58, %p59
      %p61 = scmp.ne.s32.totalorder %s52, %s53
      %p62 = scmp.eq.s32.totalorder %s21, 0
      %p63 = por %p61, %p62
      %p64 = scmp.ne.s32.totalorder %s52, %s53
      %p65 = scmp.eq.s32.totalorder %s22, 1
      %p66 = por %p64, %p65
      %p68 = scmp.ne.s32.totalorder %s53, %s67
      %p69 = scmp.eq.s32.totalorder %s22, 0
      %p70 = por %p68, %p69
      %s72 = sadd.s32 %s71, 1
      %p75 = scmp.eq.s32.totalorder %s16, 1
      %p76 = scmp.ne.s32.totalorder %s71, %s73
      %p77 = scmp.eq.s32.totalorder %s16, 0
      %p78 = por %p76, %p77
      %p79 = scmp.ne.s32.totalorder %s71, %s73
      %p80 = scmp.eq.s32.totalorder %s21, 1
      %p81 = por %p79, %p80
      %p82 = scmp.ne.s32.totalorder %s73, %s74
      %p83 = scmp.eq.s32.totalorder %s21, 0
      %p84 = por %p82, %p83
      %p85 = scmp.ne.s32.totalorder %s73, %s74
      %p86 = scmp.eq.s32.totalorder %s22, 1
      %p87 = por %p85, %p86
      %p89 = scmp.ne.s32.totalorder %s74, %s88
      %p90 = scmp.eq.s32.totalorder %s22, 0
      %p91 = por %p89, %p90
      %s93 = sadd.s32 %s92, 1
      %p96 = scmp.eq.s32.totalorder %s16, 1
      %p97 = scmp.ne.s32.totalorder %s92, %s94
      %p98 = scmp.eq.s32.totalorder %s16, 0
      %p99 = por %p97, %p98
      %p100 = scmp.ne.s32.totalorder %s92, %s94
      %p101 = scmp.eq.s32.totalorder %s21, 1
      %p102 = por %p100, %p101
      %p103 = scmp.ne.s32.totalorder %s94, %s95
      %p104 = scmp.eq.s32.totalorder %s21, 0
      %p105 = por %p103, %p104
      %p106 = scmp.ne.s32.totalorder %s94, %s95
      %p107 = scmp.eq.s32.totalorder %s22, 1
      %p108 = por %p106, %p107
      %p110 = scmp.ne.s32.totalorder %s95, %s109
      %p111 = scmp.eq.s32.totalorder %s22, 0
      %p112 = por %p110, %p111
      %s114 = sadd.s32 %s113, 1
      %p117 = scmp.eq.s32.totalorder %s16, 1
      %p118 = scmp.ne.s32.totalorder %s113, %s115
      %p119 = scmp.eq.s32.totalorder %s16, 0
      %p120 = por %p118, %p119
      %p121 = scmp.ne.s32.totalorder %s113, %s115
      %p122 = scmp.eq.s32.totalorder %s21, 1
      %p123 = por %p121, %p122
      %p124 = scmp.ne.s32.totalorder %s115, %s116
      %p125 = scmp.eq.s32.totalorder %s21, 0
      %p126 = por %p124, %p125
      %p127 = scmp.ne.s32.totalorder %s115, %s116
      %p128 = scmp.eq.s32.totalorder %s22, 1
      %p129 = por %p127, %p128
      %p131 = scmp.ne.s32.totalorder %s116, %s130
      %p132 = scmp.eq.s32.totalorder %s22, 0
      %p133 = por %p131, %p132
      %s135 = sadd.s32 %s134, 1
      %p138 = scmp.eq.s32.totalorder %s16, 1
      %p139 = scmp.ne.s32.totalorder %s134, %s136
      %p140 = scmp.eq.s32.totalorder %s16, 0
      %p141 = por %p139, %p140
      %p142 = scmp.ne.s32.totalorder %s134, %s136
      %p143 = scmp.eq.s32.totalorder %s21, 1
      %p144 = por %p142, %p143
      %p145 = scmp.ne.s32.totalorder %s136, %s137
      %p146 = scmp.eq.s32.totalorder %s21, 0
      %p147 = por %p145, %p146
      %p148 = scmp.ne.s32.totalorder %s136, %s137
      %p149 = scmp.eq.s32.totalorder %s22, 1
      %p150 = por %p148, %p149
      %p152 = scmp.ne.s32.totalorder %s137, %s151
      %p153 = scmp.eq.s32.totalorder %s22, 0
      %p154 = por %p152, %p153
      %s156 = sadd.s32 %s155, 1
      %p159 = scmp.eq.s32.totalorder %s16, 1
      %p160 = scmp.ne.s32.totalorder %s155, %s157
      %p161 = scmp.eq.s32.totalorder %s16, 0
      %p162 = por %p160, %p161
      %p163 = scmp.ne.s32.totalorder %s155, %s157
      %p164 = scmp.eq.s32.totalorder %s21, 1
      %p165 = por %p163, %p164
      %p166 = scmp.ne.s32.totalorder %s157, %s158
      %p167 = scmp.eq.s32.totalorder %s21, 0
      %p168 = por %p166, %p167
      %p169 = scmp.ne.s32.totalorder %s157, %s158
      %p170 = scmp.eq.s32.totalorder %s22, 1
      %p171 = por %p169, %p170
      %p173 = scmp.ne.s32.totalorder %s158, %s172
      %p174 = scmp.eq.s32.totalorder %s22, 0
      %p175 = por %p173, %p174
      %s176 = ssub.s32 %s16, %s23
      %p177 = scmp.eq.s32.totalorder %s176, 0
      %s179 = sadd.s32 %s178, 1
      %s180 = scalar_select %p177, %s178, %s179
      %p183 = pneg %p177
      %p184 = scmp.eq.s32.totalorder %s16, 1
      %p185 = por %p183, %p184
      %p186 = scmp.ne.s32.totalorder %s178, %s181
      %p187 = scmp.eq.s32.totalorder %s16, 0
      %p188 = por %p186, %p187
      %p189 = scmp.ne.s32.totalorder %s178, %s181
      %p190 = scmp.eq.s32.totalorder %s21, 1
      %p191 = por %p189, %p190
      %p192 = scmp.ne.s32.totalorder %s181, %s182
      %p193 = scmp.eq.s32.totalorder %s21, 0
      %p194 = por %p192, %p193
      %p195 = scmp.ne.s32.totalorder %s181, %s182
      %p196 = scmp.eq.s32.totalorder %s22, 1
      %p197 = por %p195, %p196
      %p199 = scmp.ne.s32.totalorder %s182, %s198
      %p200 = scmp.eq.s32.totalorder %s22, 0
      %p201 = por %p199, %p200
      %p202 = scmp.le.s32.totalorder 1, %s16
      %p203 = scmp.lt.s32.totalorder %s16, 3
      %p204 = pnand %p202, %p203
      %p205 = pneg %p204
      // Predicated region
      $region9: #{tpu_custom_call.1} parent=5 // pred_check
        _
      $region10: #{tpu_custom_call.1} parent=5 // pred_check_branch
        %207 = sbr.rel (%p204) target = $region12
      $region11: #{tpu_custom_call.1} parent=5 // pred_region
        %s208 = ssub.s32 %s16, 1
        // Predicated region
        $region13: #{tpu_custom_call.1} parent=11 // pred_check
          %p209 = pneg %p63
        $region14: #{tpu_custom_call.1} parent=11 // pred_check_branch
          %211 = sbr.rel (%p209) target = $region16
        $region15: #{tpu_custom_call.1} parent=11 // pred_region
          _
        $region16: #{tpu_custom_call.1} parent=11 // pred_fallthru
          _
        // Predicated region
        $region17: #{tpu_custom_call.1} parent=11 // pred_check
          %p212 = pneg %p84
        $region18: #{tpu_custom_call.1} parent=11 // pred_check_branch
          %214 = sbr.rel (%p212) target = $region20
        $region19: #{tpu_custom_call.1} parent=11 // pred_region
          _
        $region20: #{tpu_custom_call.1} parent=11 // pred_fallthru
          _
        // Predicated region
        $region21: #{tpu_custom_call.1} parent=11 // pred_check
          %p215 = pneg %p105
        $region22: #{tpu_custom_call.1} parent=11 // pred_check_branch
          %217 = sbr.rel (%p215) target = $region24
        $region23: #{tpu_custom_call.1} parent=11 // pred_region
          _
        $region24: #{tpu_custom_call.1} parent=11 // pred_fallthru
          _
        // Predicated region
        $region25: #{tpu_custom_call.1} parent=11 // pred_check
          %p218 = pneg %p126
        $region26: #{tpu_custom_call.1} parent=11 // pred_check_branch
          %220 = sbr.rel (%p218) target = $region28
        $region27: #{tpu_custom_call.1} parent=11 // pred_region
          _
        $region28: #{tpu_custom_call.1} parent=11 // pred_fallthru
          _
        // Predicated region
        $region29: #{tpu_custom_call.1} parent=11 // pred_check
          %p221 = pneg %p147
        $region30: #{tpu_custom_call.1} parent=11 // pred_check_branch
          %223 = sbr.rel (%p221) target = $region32
        $region31: #{tpu_custom_call.1} parent=11 // pred_region
          _
        $region32: #{tpu_custom_call.1} parent=11 // pred_fallthru
          _
        // Predicated region
        $region33: #{tpu_custom_call.1} parent=11 // pred_check
          %p224 = pneg %p168
        $region34: #{tpu_custom_call.1} parent=11 // pred_check_branch
          %226 = sbr.rel (%p224) target = $region36
        $region35: #{tpu_custom_call.1} parent=11 // pred_region
          _
        $region36: #{tpu_custom_call.1} parent=11 // pred_fallthru
          _
      $region12: #{tpu_custom_call.1} parent=5 // pred_fallthru
        _
      %p227 = scmp.lt.s32.totalorder %s16, 2
      // Predicated region
      $region37: #{tpu_custom_call.1} parent=5 // pred_check
        %p228 = pneg %p227
      $region38: #{tpu_custom_call.1} parent=5 // pred_check_branch
        %230 = sbr.rel (%p228) target = $region40
      $region39: #{tpu_custom_call.1} parent=5 // pred_region
        // Predicated region
        $region41: #{tpu_custom_call.1} parent=39 // pred_check
          %p231 = pneg %p36
        $region42: #{tpu_custom_call.1} parent=39 // pred_check_branch
          %233 = sbr.rel (%p231) target = $region44
        $region43: #{tpu_custom_call.1} parent=39 // pred_region
          %s234 = smul.u32 64, %s16
          %p235 = scmp.lt.s32.totalorder %s234, 127
          %s236 = scalar_select %p235, %s234, 127
          %s237 = smul.addr %s236, 8
          %s238 = scalar_lea.vmem %s0, %s237
          %s239 = smul.u32 64, %s16
        $region44: #{tpu_custom_call.1} parent=39 // pred_fallthru
          _
      $region40: #{tpu_custom_call.1} parent=5 // pred_fallthru
        _
      %p240 = scmp.le.s32.totalorder 1, %s16
      %p241 = scmp.lt.s32.totalorder %s16, 3
      %p242 = pnand %p240, %p241
      %p243 = pneg %p242
      // Predicated region
      $region45: #{tpu_custom_call.1} parent=5 // pred_check
        _
      $region46: #{tpu_custom_call.1} parent=5 // pred_check_branch
        %245 = sbr.rel (%p242) target = $region48
      $region47: #{tpu_custom_call.1} parent=5 // pred_region
        %s246 = ssub.s32 %s16, 1
        %s247 = smul.u32 64, %s21
        %p248 = scmp.lt.s32.totalorder %s247, 127
        %s249 = scalar_select %p248, %s247, 127
        %s250 = smul.addr %s249, 8
        %s251 = scalar_lea.vmem %s0, %s250
        %p252 = pneg %p42
        %p253 = pneg %p39
        %p254 = pneg %p63
        %p255 = pneg %p60
        %p256 = pneg %p84
        %p257 = pneg %p81
        %p258 = pneg %p105
        %p259 = pneg %p102
        %p260 = pneg %p126
        %p261 = pneg %p123
        %p262 = pneg %p147
        %p263 = pneg %p144
        %p264 = pneg %p168
        %p265 = pneg %p165
        %p266 = pneg %p194
        %p267 = pneg %p191
        %s268 = sand.u32 %s181, 1
        %s269 = scalar_lea.sflag [#allocation3], %s268
        %s270 = sand.u32 %s181, 1
        %s271 = smul.addr %s270, 512
        %s272 = scalar_lea.vmem [#allocation2], %s271
        %s273 = smul.u32 64, %s21
        %p274 = scmp.lt.s32.totalorder %s273, 127
        %s275 = scalar_select %p274, %s273, 127
        %s276 = smul.addr %s275, 8
        %s277 = scalar_lea.vmem %s0, %s276
        %s278 = smul.u32 64, %s21
        %s279 = smul.u32 64, %s21
        %v280 = vld [vmem:[%s277] sm:$0xff]
        %v281 = vld [vmem:[%s277 + $0x8] sm:$0xff]
        %v282 = vld [vmem:[%s277 + $0x10] sm:$0xff]
        %v283 = vld [vmem:[%s277 + $0x18] sm:$0xff]
        %v284 = vld [vmem:[%s277 + $0x20] sm:$0xff]
        %v285 = vld [vmem:[%s277 + $0x28] sm:$0xff]
        %v286 = vld [vmem:[%s277 + $0x30] sm:$0xff]
        %v287 = vld [vmem:[%s277 + $0x38] sm:$0xff]
        %v288 = vld [vmem:[%s277 + $0x40] sm:$0xff]
        %v289 = vld [vmem:[%s277 + $0x48] sm:$0xff]
        %v290 = vld [vmem:[%s277 + $0x50] sm:$0xff]
        %v291 = vld [vmem:[%s277 + $0x58] sm:$0xff]
        %v292 = vld [vmem:[%s277 + $0x60] sm:$0xff]
        %v293 = vld [vmem:[%s277 + $0x68] sm:$0xff]
        %v294 = vld [vmem:[%s277 + $0x70] sm:$0xff]
        %v295 = vld [vmem:[%s277 + $0x78] sm:$0xff]
        %v296 = vld [vmem:[%s277 + $0x80] sm:$0xff]
        %v297 = vld [vmem:[%s277 + $0x88] sm:$0xff]
        %v298 = vld [vmem:[%s277 + $0x90] sm:$0xff]
        %v299 = vld [vmem:[%s277 + $0x98] sm:$0xff]
        %v300 = vld [vmem:[%s277 + $0xa0] sm:$0xff]
        %v301 = vld [vmem:[%s277 + $0xa8] sm:$0xff]
        %v302 = vld [vmem:[%s277 + $0xb0] sm:$0xff]
        %v303 = vld [vmem:[%s277 + $0xb8] sm:$0xff]
        %v304 = vld [vmem:[%s277 + $0xc0] sm:$0xff]
        %v305 = vld [vmem:[%s277 + $0xc8] sm:$0xff]
        %v306 = vld [vmem:[%s277 + $0xd0] sm:$0xff]
        %v307 = vld [vmem:[%s277 + $0xd8] sm:$0xff]
        %v308 = vld [vmem:[%s277 + $0xe0] sm:$0xff]
        %v309 = vld [vmem:[%s277 + $0xe8] sm:$0xff]
        %v310 = vld [vmem:[%s277 + $0xf0] sm:$0xff]
        %v311 = vld [vmem:[%s277 + $0xf8] sm:$0xff]
        %v312 = vld [vmem:[%s277 + $0x100] sm:$0xff]
        %v313 = vld [vmem:[%s277 + $0x108] sm:$0xff]
        %v314 = vld [vmem:[%s277 + $0x110] sm:$0xff]
        %v315 = vld [vmem:[%s277 + $0x118] sm:$0xff]
        %v316 = vld [vmem:[%s277 + $0x120] sm:$0xff]
        %v317 = vld [vmem:[%s277 + $0x128] sm:$0xff]
        %v318 = vld [vmem:[%s277 + $0x130] sm:$0xff]
        %v319 = vld [vmem:[%s277 + $0x138] sm:$0xff]
        %v320 = vld [vmem:[%s277 + $0x140] sm:$0xff]
        %v321 = vld [vmem:[%s277 + $0x148] sm:$0xff]
        %v322 = vld [vmem:[%s277 + $0x150] sm:$0xff]
        %v323 = vld [vmem:[%s277 + $0x158] sm:$0xff]
        %v324 = vld [vmem:[%s277 + $0x160] sm:$0xff]
        %v325 = vld [vmem:[%s277 + $0x168] sm:$0xff]
        %v326 = vld [vmem:[%s277 + $0x170] sm:$0xff]
        %v327 = vld [vmem:[%s277 + $0x178] sm:$0xff]
        %v328 = vld [vmem:[%s277 + $0x180] sm:$0xff]
        %v329 = vld [vmem:[%s277 + $0x188] sm:$0xff]
        %v330 = vld [vmem:[%s277 + $0x190] sm:$0xff]
        %v331 = vld [vmem:[%s277 + $0x198] sm:$0xff]
        %v332 = vld [vmem:[%s277 + $0x1a0] sm:$0xff]
        %v333 = vld [vmem:[%s277 + $0x1a8] sm:$0xff]
        %v334 = vld [vmem:[%s277 + $0x1b0] sm:$0xff]
        %v335 = vld [vmem:[%s277 + $0x1b8] sm:$0xff]
        %v336 = vld [vmem:[%s277 + $0x1c0] sm:$0xff]
        %v337 = vld [vmem:[%s277 + $0x1c8] sm:$0xff]
        %v338 = vld [vmem:[%s277 + $0x1d0] sm:$0xff]
        %v339 = vld [vmem:[%s277 + $0x1d8] sm:$0xff]
        %v340 = vld [vmem:[%s277 + $0x1e0] sm:$0xff]
        %v341 = vld [vmem:[%s277 + $0x1e8] sm:$0xff]
        %v342 = vld [vmem:[%s277 + $0x1f0] sm:$0xff]
        %v343 = vld [vmem:[%s277 + $0x1f8] sm:$0xff]
        %v344 = vld [vmem:[%s1] sm:$0xff]
        %v345 = vld [vmem:[%s2] sm:$0x1]
        %v347 = vlaneseq
        %v348 = vshrl.u32 %v347, 7
        %v349 = vsub.s32 0, %v348
        %v350 = vrot.slane %v345, %v349
        %vm352 = vcmask 64512
        %v354 = vsel %vm352, %v280, 0
        %v357 = vsel %vm352, %v281, 0
        %v360 = vsel %vm352, %v282, 0
        %v363 = vsel %vm352, %v283, 0
        %v366 = vsel %vm352, %v284, 0
        %v369 = vsel %vm352, %v285, 0
        %v372 = vsel %vm352, %v286, 0
        %v375 = vsel %vm352, %v287, 0
        %v378 = vsel %vm352, %v288, 0
        %v381 = vsel %vm352, %v289, 0
        %v384 = vsel %vm352, %v290, 0
        %v387 = vsel %vm352, %v291, 0
        %v390 = vsel %vm352, %v292, 0
        %v393 = vsel %vm352, %v293, 0
        %v396 = vsel %vm352, %v294, 0
        %v399 = vsel %vm352, %v295, 0
        %v402 = vsel %vm352, %v296, 0
        %v405 = vsel %vm352, %v297, 0
        %v408 = vsel %vm352, %v298, 0
        %v411 = vsel %vm352, %v299, 0
        %v414 = vsel %vm352, %v300, 0
        %v417 = vsel %vm352, %v301, 0
        %v420 = vsel %vm352, %v302, 0
        %v423 = vsel %vm352, %v303, 0
        %v426 = vsel %vm352, %v304, 0
        %v429 = vsel %vm352, %v305, 0
        %v432 = vsel %vm352, %v306, 0
        %v435 = vsel %vm352, %v307, 0
        %v438 = vsel %vm352, %v308, 0
        %v441 = vsel %vm352, %v309, 0
        %v444 = vsel %vm352, %v310, 0
        %v447 = vsel %vm352, %v311, 0
        %v450 = vsel %vm352, %v312, 0
        %v453 = vsel %vm352, %v313, 0
        %v456 = vsel %vm352, %v314, 0
        %v459 = vsel %vm352, %v315, 0
        %v462 = vsel %vm352, %v316, 0
        %v465 = vsel %vm352, %v317, 0
        %v468 = vsel %vm352, %v318, 0
        %v471 = vsel %vm352, %v319, 0
        %v474 = vsel %vm352, %v320, 0
        %v477 = vsel %vm352, %v321, 0
        %v480 = vsel %vm352, %v322, 0
        %v483 = vsel %vm352, %v323, 0
        %v486 = vsel %vm352, %v324, 0
        %v489 = vsel %vm352, %v325, 0
        %v492 = vsel %vm352, %v326, 0
        %v495 = vsel %vm352, %v327, 0
        %v498 = vsel %vm352, %v328, 0
        %v501 = vsel %vm352, %v329, 0
        %v504 = vsel %vm352, %v330, 0
        %v507 = vsel %vm352, %v331, 0
        %v510 = vsel %vm352, %v332, 0
        %v513 = vsel %vm352, %v333, 0
        %v516 = vsel %vm352, %v334, 0
        %v519 = vsel %vm352, %v335, 0
        %v522 = vsel %vm352, %v336, 0
        %v525 = vsel %vm352, %v337, 0
        %v528 = vsel %vm352, %v338, 0
        %v531 = vsel %vm352, %v339, 0
        %v534 = vsel %vm352, %v340, 0
        %v537 = vsel %vm352, %v341, 0
        %v540 = vsel %vm352, %v342, 0
        %v543 = vsel %vm352, %v343, 0
        %545 = vmatprep.subr.mxu0 0.0
        %546 = vmatpush1.msra.mxu0 0.0
        %547 = vmatprep.subr.mxu0 0.0
        %548 = vmatpush1.msra.mxu0 0.0
        %549 = vmatprep.subr.mxu0 0.0
        %550 = vmatpush1.msra.mxu0 0.0
        %551 = vmatprep.subr.mxu0 0.0
        %552 = vmatpush1.msra.mxu0 0.0
        %553 = vmatprep.subr.mxu0 0.0
        %554 = vmatpush1.msra.mxu0 0.0
        %555 = vmatprep.subr.mxu0 0.0
        %556 = vmatpush1.msra.mxu0 0.0
        %557 = vmatprep.subr.mxu0 0.0
        %558 = vmatpush1.msra.mxu0 0.0
        %559 = vmatprep.subr.mxu0 0.0
        %560 = vmatpush1.msra.mxu0 0.0
        %561 = vmatprep.subr.mxu0 0.0
        %562 = vmatpush1.msra.mxu0 0.0
        %563 = vmatprep.subr.mxu0 0.0
        %564 = vmatpush1.msra.mxu0 0.0
        %565 = vmatprep.subr.mxu0 0.0
        %566 = vmatpush1.msra.mxu0 0.0
        %567 = vmatprep.subr.mxu0 0.0
        %568 = vmatpush1.msra.mxu0 0.0
        %569 = vmatprep.subr.mxu0 0.0
        %570 = vmatpush1.msra.mxu0 0.0
        %571 = vmatprep.subr.mxu0 0.0
        %572 = vmatpush1.msra.mxu0 0.0
        %573 = vmatprep.subr.mxu0 0.0
        %574 = vmatpush1.msra.mxu0 0.0
        %575 = vmatprep.subr.mxu0 0.0
        %576 = vmatpush1.msra.mxu0 %v344
        %577 = vmatprep.subr.mxu0 0.0
        %578 = vmatpush2.msra.mxu0 0.0
        %579 = vmatprep.subr.mxu0 0.0
        %580 = vmatpush2.msra.mxu0 0.0
        %581 = vmatprep.subr.mxu0 0.0
        %582 = vmatpush2.msra.mxu0 0.0
        %583 = vmatprep.subr.mxu0 0.0
        %584 = vmatpush2.msra.mxu0 0.0
        %585 = vmatprep.subr.mxu0 0.0
        %586 = vmatpush2.msra.mxu0 0.0
        %587 = vmatprep.subr.mxu0 0.0
        %588 = vmatpush2.msra.mxu0 0.0
        %589 = vmatprep.subr.mxu0 0.0
        %590 = vmatpush2.msra.mxu0 0.0
        %591 = vmatprep.subr.mxu0 0.0
        %592 = vmatpush2.msra.mxu0 0.0
        %593 = vmatprep.subr.mxu0 0.0
        %594 = vmatpush2.msra.mxu0 0.0
        %595 = vmatprep.subr.mxu0 0.0
        %596 = vmatpush2.msra.mxu0 0.0
        %597 = vmatprep.subr.mxu0 0.0
        %598 = vmatpush2.msra.mxu0 0.0
        %599 = vmatprep.subr.mxu0 0.0
        %600 = vmatpush2.msra.mxu0 0.0
        %601 = vmatprep.subr.mxu0 0.0
        %602 = vmatpush2.msra.mxu0 0.0
        %603 = vmatprep.subr.mxu0 0.0
        %604 = vmatpush2.msra.mxu0 0.0
        %605 = vmatprep.subr.mxu0 0.0
        %606 = vmatpush2.msra.mxu0 0.0
        %607 = vmatprep.subr.mxu0 0.0
        %608 = vmatpush2.msra.mxu0 0.0
        %609 = vmatprep.mubr.f32.mxu0 0.0
        %610 = vmatmul.mubr.f32.gmra.mxu0 %v354
        %v611 = vpop.f32.mrf.mxu0
        %v612 = vadd.f32 %v350, %v611
        %v613 = vpop.f32.mrf.mxu0
        %614 = vmatprep.mubr.f32.mxu0 0.0
        %615 = vmatmul.mubr.f32.gmra.mxu0 %v357
        %v616 = vpop.f32.mrf.mxu0
        %v617 = vadd.f32 %v350, %v616
        %v618 = vpop.f32.mrf.mxu0
        %619 = vmatprep.mubr.f32.mxu0 0.0
        %620 = vmatmul.mubr.f32.gmra.mxu0 %v360
        %v621 = vpop.f32.mrf.mxu0
        %v622 = vadd.f32 %v350, %v621
        %v623 = vpop.f32.mrf.mxu0
        %624 = vmatprep.mubr.f32.mxu0 0.0
        %625 = vmatmul.mubr.f32.gmra.mxu0 %v363
        %v626 = vpop.f32.mrf.mxu0
        %v627 = vadd.f32 %v350, %v626
        %v628 = vpop.f32.mrf.mxu0
        %629 = vmatprep.mubr.f32.mxu0 0.0
        %630 = vmatmul.mubr.f32.gmra.mxu0 %v366
        %v631 = vpop.f32.mrf.mxu0
        %v632 = vadd.f32 %v350, %v631
        %v633 = vpop.f32.mrf.mxu0
        %634 = vmatprep.mubr.f32.mxu0 0.0
        %635 = vmatmul.mubr.f32.gmra.mxu0 %v369
        %v636 = vpop.f32.mrf.mxu0
        %v637 = vadd.f32 %v350, %v636
        %v638 = vpop.f32.mrf.mxu0
        %639 = vmatprep.mubr.f32.mxu0 0.0
        %640 = vmatmul.mubr.f32.gmra.mxu0 %v372
        %v641 = vpop.f32.mrf.mxu0
        %v642 = vadd.f32 %v350, %v641
        %v643 = vpop.f32.mrf.mxu0
        %644 = vmatprep.mubr.f32.mxu0 0.0
        %645 = vmatmul.mubr.f32.gmra.mxu0 %v375
        %v646 = vpop.f32.mrf.mxu0
        %v647 = vadd.f32 %v350, %v646
        %v648 = vpop.f32.mrf.mxu0
        %649 = vmatprep.mubr.f32.mxu0 0.0
        %650 = vmatmul.mubr.f32.gmra.mxu0 %v378
        %v651 = vpop.f32.mrf.mxu0
        %v652 = vadd.f32 %v350, %v651
        %v653 = vpop.f32.mrf.mxu0
        %654 = vmatprep.mubr.f32.mxu0 0.0
        %655 = vmatmul.mubr.f32.gmra.mxu0 %v381
        %v656 = vpop.f32.mrf.mxu0
        %v657 = vadd.f32 %v350, %v656
        %v658 = vpop.f32.mrf.mxu0
        %659 = vmatprep.mubr.f32.mxu0 0.0
        %660 = vmatmul.mubr.f32.gmra.mxu0 %v384
        %v661 = vpop.f32.mrf.mxu0
        %v662 = vadd.f32 %v350, %v661
        %v663 = vpop.f32.mrf.mxu0
        %664 = vmatprep.mubr.f32.mxu0 0.0
        %665 = vmatmul.mubr.f32.gmra.mxu0 %v387
        %v666 = vpop.f32.mrf.mxu0
        %v667 = vadd.f32 %v350, %v666
        %v668 = vpop.f32.mrf.mxu0
        %669 = vmatprep.mubr.f32.mxu0 0.0
        %670 = vmatmul.mubr.f32.gmra.mxu0 %v390
        %v671 = vpop.f32.mrf.mxu0
        %v672 = vadd.f32 %v350, %v671
        %v673 = vpop.f32.mrf.mxu0
        %674 = vmatprep.mubr.f32.mxu0 0.0
        %675 = vmatmul.mubr.f32.gmra.mxu0 %v393
        %v676 = vpop.f32.mrf.mxu0
        %v677 = vadd.f32 %v350, %v676
        %v678 = vpop.f32.mrf.mxu0
        %679 = vmatprep.mubr.f32.mxu0 0.0
        %680 = vmatmul.mubr.f32.gmra.mxu0 %v396
        %v681 = vpop.f32.mrf.mxu0
        %v682 = vadd.f32 %v350, %v681
        %v683 = vpop.f32.mrf.mxu0
        %684 = vmatprep.mubr.f32.mxu0 0.0
        %685 = vmatmul.mubr.f32.gmra.mxu0 %v399
        %v686 = vpop.f32.mrf.mxu0
        %v687 = vadd.f32 %v350, %v686
        %v688 = vpop.f32.mrf.mxu0
        %689 = vmatprep.mubr.f32.mxu0 0.0
        %690 = vmatmul.mubr.f32.gmra.mxu0 %v402
        %v691 = vpop.f32.mrf.mxu0
        %v692 = vadd.f32 %v350, %v691
        %v693 = vpop.f32.mrf.mxu0
        %694 = vmatprep.mubr.f32.mxu0 0.0
        %695 = vmatmul.mubr.f32.gmra.mxu0 %v405
        %v696 = vpop.f32.mrf.mxu0
        %v697 = vadd.f32 %v350, %v696
        %v698 = vpop.f32.mrf.mxu0
        %699 = vmatprep.mubr.f32.mxu0 0.0
        %700 = vmatmul.mubr.f32.gmra.mxu0 %v408
        %v701 = vpop.f32.mrf.mxu0
        %v702 = vadd.f32 %v350, %v701
        %v703 = vpop.f32.mrf.mxu0
        %704 = vmatprep.mubr.f32.mxu0 0.0
        %705 = vmatmul.mubr.f32.gmra.mxu0 %v411
        %v706 = vpop.f32.mrf.mxu0
        %v707 = vadd.f32 %v350, %v706
        %v708 = vpop.f32.mrf.mxu0
        %709 = vmatprep.mubr.f32.mxu0 0.0
        %710 = vmatmul.mubr.f32.gmra.mxu0 %v414
        %v711 = vpop.f32.mrf.mxu0
        %v712 = vadd.f32 %v350, %v711
        %v713 = vpop.f32.mrf.mxu0
        %714 = vmatprep.mubr.f32.mxu0 0.0
        %715 = vmatmul.mubr.f32.gmra.mxu0 %v417
        %v716 = vpop.f32.mrf.mxu0
        %v717 = vadd.f32 %v350, %v716
        %v718 = vpop.f32.mrf.mxu0
        %719 = vmatprep.mubr.f32.mxu0 0.0
        %720 = vmatmul.mubr.f32.gmra.mxu0 %v420
        %v721 = vpop.f32.mrf.mxu0
        %v722 = vadd.f32 %v350, %v721
        %v723 = vpop.f32.mrf.mxu0
        %724 = vmatprep.mubr.f32.mxu0 0.0
        %725 = vmatmul.mubr.f32.gmra.mxu0 %v423
        %v726 = vpop.f32.mrf.mxu0
        %v727 = vadd.f32 %v350, %v726
        %v728 = vpop.f32.mrf.mxu0
        %729 = vmatprep.mubr.f32.mxu0 0.0
        %730 = vmatmul.mubr.f32.gmra.mxu0 %v426
        %v731 = vpop.f32.mrf.mxu0
        %v732 = vadd.f32 %v350, %v731
        %v733 = vpop.f32.mrf.mxu0
        %734 = vmatprep.mubr.f32.mxu0 0.0
        %735 = vmatmul.mubr.f32.gmra.mxu0 %v429
        %v736 = vpop.f32.mrf.mxu0
        %v737 = vadd.f32 %v350, %v736
        %v738 = vpop.f32.mrf.mxu0
        %739 = vmatprep.mubr.f32.mxu0 0.0
        %740 = vmatmul.mubr.f32.gmra.mxu0 %v432
        %v741 = vpop.f32.mrf.mxu0
        %v742 = vadd.f32 %v350, %v741
        %v743 = vpop.f32.mrf.mxu0
        %744 = vmatprep.mubr.f32.mxu0 0.0
        %745 = vmatmul.mubr.f32.gmra.mxu0 %v435
        %v746 = vpop.f32.mrf.mxu0
        %v747 = vadd.f32 %v350, %v746
        %v748 = vpop.f32.mrf.mxu0
        %749 = vmatprep.mubr.f32.mxu0 0.0
        %750 = vmatmul.mubr.f32.gmra.mxu0 %v438
        %v751 = vpop.f32.mrf.mxu0
        %v752 = vadd.f32 %v350, %v751
        %v753 = vpop.f32.mrf.mxu0
        %754 = vmatprep.mubr.f32.mxu0 0.0
        %755 = vmatmul.mubr.f32.gmra.mxu0 %v441
        %v756 = vpop.f32.mrf.mxu0
        %v757 = vadd.f32 %v350, %v756
        %v758 = vpop.f32.mrf.mxu0
        %759 = vmatprep.mubr.f32.mxu0 0.0
        %760 = vmatmul.mubr.f32.gmra.mxu0 %v444
        %v761 = vpop.f32.mrf.mxu0
        %v762 = vadd.f32 %v350, %v761
        %v763 = vpop.f32.mrf.mxu0
        %764 = vmatprep.mubr.f32.mxu0 0.0
        %765 = vmatmul.mubr.f32.gmra.mxu0 %v447
        %v766 = vpop.f32.mrf.mxu0
        %v767 = vadd.f32 %v350, %v766
        %v768 = vpop.f32.mrf.mxu0
        %769 = vmatprep.mubr.f32.mxu0 0.0
        %770 = vmatmul.mubr.f32.gmra.mxu0 %v450
        %v771 = vpop.f32.mrf.mxu0
        %v772 = vadd.f32 %v350, %v771
        %v773 = vpop.f32.mrf.mxu0
        %774 = vmatprep.mubr.f32.mxu0 0.0
        %775 = vmatmul.mubr.f32.gmra.mxu0 %v453
        %v776 = vpop.f32.mrf.mxu0
        %v777 = vadd.f32 %v350, %v776
        %v778 = vpop.f32.mrf.mxu0
        %779 = vmatprep.mubr.f32.mxu0 0.0
        %780 = vmatmul.mubr.f32.gmra.mxu0 %v456
        %v781 = vpop.f32.mrf.mxu0
        %v782 = vadd.f32 %v350, %v781
        %v783 = vpop.f32.mrf.mxu0
        %784 = vmatprep.mubr.f32.mxu0 0.0
        %785 = vmatmul.mubr.f32.gmra.mxu0 %v459
        %v786 = vpop.f32.mrf.mxu0
        %v787 = vadd.f32 %v350, %v786
        %v788 = vpop.f32.mrf.mxu0
        %789 = vmatprep.mubr.f32.mxu0 0.0
        %790 = vmatmul.mubr.f32.gmra.mxu0 %v462
        %v791 = vpop.f32.mrf.mxu0
        %v792 = vadd.f32 %v350, %v791
        %v793 = vpop.f32.mrf.mxu0
        %794 = vmatprep.mubr.f32.mxu0 0.0
        %795 = vmatmul.mubr.f32.gmra.mxu0 %v465
        %v796 = vpop.f32.mrf.mxu0
        %v797 = vadd.f32 %v350, %v796
        %v798 = vpop.f32.mrf.mxu0
        %799 = vmatprep.mubr.f32.mxu0 0.0
        %800 = vmatmul.mubr.f32.gmra.mxu0 %v468
        %v801 = vpop.f32.mrf.mxu0
        %v802 = vadd.f32 %v350, %v801
        %v803 = vpop.f32.mrf.mxu0
        %804 = vmatprep.mubr.f32.mxu0 0.0
        %805 = vmatmul.mubr.f32.gmra.mxu0 %v471
        %v806 = vpop.f32.mrf.mxu0
        %v807 = vadd.f32 %v350, %v806
        %v808 = vpop.f32.mrf.mxu0
        %809 = vmatprep.mubr.f32.mxu0 0.0
        %810 = vmatmul.mubr.f32.gmra.mxu0 %v474
        %v811 = vpop.f32.mrf.mxu0
        %v812 = vadd.f32 %v350, %v811
        %v813 = vpop.f32.mrf.mxu0
        %814 = vmatprep.mubr.f32.mxu0 0.0
        %815 = vmatmul.mubr.f32.gmra.mxu0 %v477
        %v816 = vpop.f32.mrf.mxu0
        %v817 = vadd.f32 %v350, %v816
        %v818 = vpop.f32.mrf.mxu0
        %819 = vmatprep.mubr.f32.mxu0 0.0
        %820 = vmatmul.mubr.f32.gmra.mxu0 %v480
        %v821 = vpop.f32.mrf.mxu0
        %v822 = vadd.f32 %v350, %v821
        %v823 = vpop.f32.mrf.mxu0
        %824 = vmatprep.mubr.f32.mxu0 0.0
        %825 = vmatmul.mubr.f32.gmra.mxu0 %v483
        %v826 = vpop.f32.mrf.mxu0
        %v827 = vadd.f32 %v350, %v826
        %v828 = vpop.f32.mrf.mxu0
        %829 = vmatprep.mubr.f32.mxu0 0.0
        %830 = vmatmul.mubr.f32.gmra.mxu0 %v486
        %v831 = vpop.f32.mrf.mxu0
        %v832 = vadd.f32 %v350, %v831
        %v833 = vpop.f32.mrf.mxu0
        %834 = vmatprep.mubr.f32.mxu0 0.0
        %835 = vmatmul.mubr.f32.gmra.mxu0 %v489
        %v836 = vpop.f32.mrf.mxu0
        %v837 = vadd.f32 %v350, %v836
        %v838 = vpop.f32.mrf.mxu0
        %839 = vmatprep.mubr.f32.mxu0 0.0
        %840 = vmatmul.mubr.f32.gmra.mxu0 %v492
        %v841 = vpop.f32.mrf.mxu0
        %v842 = vadd.f32 %v350, %v841
        %v843 = vpop.f32.mrf.mxu0
        %844 = vmatprep.mubr.f32.mxu0 0.0
        %845 = vmatmul.mubr.f32.gmra.mxu0 %v495
        %v846 = vpop.f32.mrf.mxu0
        %v847 = vadd.f32 %v350, %v846
        %v848 = vpop.f32.mrf.mxu0
        %849 = vmatprep.mubr.f32.mxu0 0.0
        %850 = vmatmul.mubr.f32.gmra.mxu0 %v498
        %v851 = vpop.f32.mrf.mxu0
        %v852 = vadd.f32 %v350, %v851
        %v853 = vpop.f32.mrf.mxu0
        %854 = vmatprep.mubr.f32.mxu0 0.0
        %855 = vmatmul.mubr.f32.gmra.mxu0 %v501
        %v856 = vpop.f32.mrf.mxu0
        %v857 = vadd.f32 %v350, %v856
        %v858 = vpop.f32.mrf.mxu0
        %859 = vmatprep.mubr.f32.mxu0 0.0
        %860 = vmatmul.mubr.f32.gmra.mxu0 %v504
        %v861 = vpop.f32.mrf.mxu0
        %v862 = vadd.f32 %v350, %v861
        %v863 = vpop.f32.mrf.mxu0
        %864 = vmatprep.mubr.f32.mxu0 0.0
        %865 = vmatmul.mubr.f32.gmra.mxu0 %v507
        %v866 = vpop.f32.mrf.mxu0
        %v867 = vadd.f32 %v350, %v866
        %v868 = vpop.f32.mrf.mxu0
        %869 = vmatprep.mubr.f32.mxu0 0.0
        %870 = vmatmul.mubr.f32.gmra.mxu0 %v510
        %v871 = vpop.f32.mrf.mxu0
        %v872 = vadd.f32 %v350, %v871
        %v873 = vpop.f32.mrf.mxu0
        %874 = vmatprep.mubr.f32.mxu0 0.0
        %875 = vmatmul.mubr.f32.gmra.mxu0 %v513
        %v876 = vpop.f32.mrf.mxu0
        %v877 = vadd.f32 %v350, %v876
        %v878 = vpop.f32.mrf.mxu0
        %879 = vmatprep.mubr.f32.mxu0 0.0
        %880 = vmatmul.mubr.f32.gmra.mxu0 %v516
        %v881 = vpop.f32.mrf.mxu0
        %v882 = vadd.f32 %v350, %v881
        %v883 = vpop.f32.mrf.mxu0
        %884 = vmatprep.mubr.f32.mxu0 0.0
        %885 = vmatmul.mubr.f32.gmra.mxu0 %v519
        %v886 = vpop.f32.mrf.mxu0
        %v887 = vadd.f32 %v350, %v886
        %v888 = vpop.f32.mrf.mxu0
        %889 = vmatprep.mubr.f32.mxu0 0.0
        %890 = vmatmul.mubr.f32.gmra.mxu0 %v522
        %v891 = vpop.f32.mrf.mxu0
        %v892 = vadd.f32 %v350, %v891
        %v893 = vpop.f32.mrf.mxu0
        %894 = vmatprep.mubr.f32.mxu0 0.0
        %895 = vmatmul.mubr.f32.gmra.mxu0 %v525
        %v896 = vpop.f32.mrf.mxu0
        %v897 = vadd.f32 %v350, %v896
        %v898 = vpop.f32.mrf.mxu0
        %899 = vmatprep.mubr.f32.mxu0 0.0
        %900 = vmatmul.mubr.f32.gmra.mxu0 %v528
        %v901 = vpop.f32.mrf.mxu0
        %v902 = vadd.f32 %v350, %v901
        %v903 = vpop.f32.mrf.mxu0
        %904 = vmatprep.mubr.f32.mxu0 0.0
        %905 = vmatmul.mubr.f32.gmra.mxu0 %v531
        %v906 = vpop.f32.mrf.mxu0
        %v907 = vadd.f32 %v350, %v906
        %v908 = vpop.f32.mrf.mxu0
        %909 = vmatprep.mubr.f32.mxu0 0.0
        %910 = vmatmul.mubr.f32.gmra.mxu0 %v534
        %v911 = vpop.f32.mrf.mxu0
        %v912 = vadd.f32 %v350, %v911
        %v913 = vpop.f32.mrf.mxu0
        %914 = vmatprep.mubr.f32.mxu0 0.0
        %915 = vmatmul.mubr.f32.gmra.mxu0 %v537
        %v916 = vpop.f32.mrf.mxu0
        %v917 = vadd.f32 %v350, %v916
        %v918 = vpop.f32.mrf.mxu0
        %919 = vmatprep.mubr.f32.mxu0 0.0
        %920 = vmatmul.mubr.f32.gmra.mxu0 %v540
        %v921 = vpop.f32.mrf.mxu0
        %v922 = vadd.f32 %v350, %v921
        %v923 = vpop.f32.mrf.mxu0
        %924 = vmatprep.mubr.f32.mxu0 0.0
        %925 = vmatmul.mubr.f32.gmra.mxu0 %v543
        %v926 = vpop.f32.mrf.mxu0
        %v927 = vadd.f32 %v350, %v926
        %v928 = vpop.f32.mrf.mxu0
        %929 = vdwg.mxu0
        %v930 = vtanh.pop %v612
        %v931 = vtanh.pop %v617
        %v932 = vtanh.pop %v622
        %v933 = vtanh.pop %v627
        %v934 = vtanh.pop %v632
        %v935 = vtanh.pop %v637
        %v936 = vtanh.pop %v642
        %v937 = vtanh.pop %v647
        %v938 = vtanh.pop %v652
        %v939 = vtanh.pop %v657
        %v940 = vtanh.pop %v662
        %v941 = vtanh.pop %v667
        %v942 = vtanh.pop %v672
        %v943 = vtanh.pop %v677
        %v944 = vtanh.pop %v682
        %v945 = vtanh.pop %v687
        %v946 = vtanh.pop %v692
        %v947 = vtanh.pop %v697
        %v948 = vtanh.pop %v702
        %v949 = vtanh.pop %v707
        %v950 = vtanh.pop %v712
        %v951 = vtanh.pop %v717
        %v952 = vtanh.pop %v722
        %v953 = vtanh.pop %v727
        %v954 = vtanh.pop %v732
        %v955 = vtanh.pop %v737
        %v956 = vtanh.pop %v742
        %v957 = vtanh.pop %v747
        %v958 = vtanh.pop %v752
        %v959 = vtanh.pop %v757
        %v960 = vtanh.pop %v762
        %v961 = vtanh.pop %v767
        %v962 = vtanh.pop %v772
        %v963 = vtanh.pop %v777
        %v964 = vtanh.pop %v782
        %v965 = vtanh.pop %v787
        %v966 = vtanh.pop %v792
        %v967 = vtanh.pop %v797
        %v968 = vtanh.pop %v802
        %v969 = vtanh.pop %v807
        %v970 = vtanh.pop %v812
        %v971 = vtanh.pop %v817
        %v972 = vtanh.pop %v822
        %v973 = vtanh.pop %v827
        %v974 = vtanh.pop %v832
        %v975 = vtanh.pop %v837
        %v976 = vtanh.pop %v842
        %v977 = vtanh.pop %v847
        %v978 = vtanh.pop %v852
        %v979 = vtanh.pop %v857
        %v980 = vtanh.pop %v862
        %v981 = vtanh.pop %v867
        %v982 = vtanh.pop %v872
        %v983 = vtanh.pop %v877
        %v984 = vtanh.pop %v882
        %v985 = vtanh.pop %v887
        %v986 = vtanh.pop %v892
        %v987 = vtanh.pop %v897
        %v988 = vtanh.pop %v902
        %v989 = vtanh.pop %v907
        %v990 = vtanh.pop %v912
        %v991 = vtanh.pop %v917
        %v992 = vtanh.pop %v922
        %v993 = vtanh.pop %v927
        %v994 = vld [vmem:[%s3] sm:$0xff]
        %v995 = vld [vmem:[%s3 + $0x8] sm:$0xff]
        %v996 = vld [vmem:[%s3 + $0x10] sm:$0xff]
        %v997 = vld [vmem:[%s3 + $0x18] sm:$0xff]
        %v998 = vld [vmem:[%s3 + $0x20] sm:$0xff]
        %v999 = vld [vmem:[%s3 + $0x28] sm:$0xff]
        %v1000 = vld [vmem:[%s3 + $0x30] sm:$0xff]
        %v1001 = vld [vmem:[%s3 + $0x38] sm:$0xff]
        %v1002 = vld [vmem:[%s3 + $0x40] sm:$0xff]
        %v1003 = vld [vmem:[%s3 + $0x48] sm:$0xff]
        %v1004 = vld [vmem:[%s3 + $0x50] sm:$0xff]
        %v1005 = vld [vmem:[%s3 + $0x58] sm:$0xff]
        %v1006 = vld [vmem:[%s3 + $0x60] sm:$0xff]
        %v1007 = vld [vmem:[%s3 + $0x68] sm:$0xff]
        %v1008 = vld [vmem:[%s3 + $0x70] sm:$0xff]
        %v1009 = vld [vmem:[%s3 + $0x78] sm:$0xff]
        %v1010 = vld [vmem:[%s4] sm:$0x1]
        %v1012 = vlaneseq
        %v1013 = vshrl.u32 %v1012, 7
        %v1014 = vsub.s32 0, %v1013
        %v1015 = vrot.slane %v1010, %v1014
        %1017 = vmatprep.subr.mxu0 0.0
        %1018 = vmatpush1.msra.mxu0 %v1009
        %1019 = vmatprep.subr.mxu0 0.0
        %1020 = vmatpush1.msra.mxu0 %v1008
        %1021 = vmatprep.subr.mxu0 0.0
        %1022 = vmatpush1.msra.mxu0 %v1007
        %1023 = vmatprep.subr.mxu0 0.0
        %1024 = vmatpush1.msra.mxu0 %v1006
        %1025 = vmatprep.subr.mxu0 0.0
        %1026 = vmatpush1.msra.mxu0 %v1005
        %1027 = vmatprep.subr.mxu0 0.0
        %1028 = vmatpush1.msra.mxu0 %v1004
        %1029 = vmatprep.subr.mxu0 0.0
        %1030 = vmatpush1.msra.mxu0 %v1003
        %1031 = vmatprep.subr.mxu0 0.0
        %1032 = vmatpush1.msra.mxu0 %v1002
        %1033 = vmatprep.subr.mxu0 0.0
        %1034 = vmatpush1.msra.mxu0 %v1001
        %1035 = vmatprep.subr.mxu0 0.0
        %1036 = vmatpush1.msra.mxu0 %v1000
        %1037 = vmatprep.subr.mxu0 0.0
        %1038 = vmatpush1.msra.mxu0 %v999
        %1039 = vmatprep.subr.mxu0 0.0
        %1040 = vmatpush1.msra.mxu0 %v998
        %1041 = vmatprep.subr.mxu0 0.0
        %1042 = vmatpush1.msra.mxu0 %v997
        %1043 = vmatprep.subr.mxu0 0.0
        %1044 = vmatpush1.msra.mxu0 %v996
        %1045 = vmatprep.subr.mxu0 0.0
        %1046 = vmatpush1.msra.mxu0 %v995
        %1047 = vmatprep.subr.mxu0 0.0
        %1048 = vmatpush1.msra.mxu0 %v994
        %1049 = vmatprep.subr.mxu0 0.0
        %1050 = vmatpush2.msra.mxu0 0.0
        %1051 = vmatprep.subr.mxu0 0.0
        %1052 = vmatpush2.msra.mxu0 0.0
        %1053 = vmatprep.subr.mxu0 0.0
        %1054 = vmatpush2.msra.mxu0 0.0
        %1055 = vmatprep.subr.mxu0 0.0
        %1056 = vmatpush2.msra.mxu0 0.0
        %1057 = vmatprep.subr.mxu0 0.0
        %1058 = vmatpush2.msra.mxu0 0.0
        %1059 = vmatprep.subr.mxu0 0.0
        %1060 = vmatpush2.msra.mxu0 0.0
        %1061 = vmatprep.subr.mxu0 0.0
        %1062 = vmatpush2.msra.mxu0 0.0
        %1063 = vmatprep.subr.mxu0 0.0
        %1064 = vmatpush2.msra.mxu0 0.0
        %1065 = vmatprep.subr.mxu0 0.0
        %1066 = vmatpush2.msra.mxu0 0.0
        %1067 = vmatprep.subr.mxu0 0.0
        %1068 = vmatpush2.msra.mxu0 0.0
        %1069 = vmatprep.subr.mxu0 0.0
        %1070 = vmatpush2.msra.mxu0 0.0
        %1071 = vmatprep.subr.mxu0 0.0
        %1072 = vmatpush2.msra.mxu0 0.0
        %1073 = vmatprep.subr.mxu0 0.0
        %1074 = vmatpush2.msra.mxu0 0.0
        %1075 = vmatprep.subr.mxu0 0.0
        %1076 = vmatpush2.msra.mxu0 0.0
        %1077 = vmatprep.subr.mxu0 0.0
        %1078 = vmatpush2.msra.mxu0 0.0
        %1079 = vmatprep.subr.mxu0 0.0
        %1080 = vmatpush2.msra.mxu0 0.0
        %1081 = vmatprep.mubr.f32.mxu0 0.0
        %1082 = vmatmul.mubr.f32.gmra.mxu0 %v930
        %v1083 = vpop.f32.mrf.mxu0
        %v1084 = vadd.f32 %v1015, %v1083
        %v1085 = vpop.f32.mrf.mxu0
        %1086 = vmatprep.mubr.f32.mxu0 0.0
        %1087 = vmatmul.mubr.f32.gmra.mxu0 %v931
        %v1088 = vpop.f32.mrf.mxu0
        %v1089 = vadd.f32 %v1015, %v1088
        %v1090 = vpop.f32.mrf.mxu0
        %1091 = vmatprep.mubr.f32.mxu0 0.0
        %1092 = vmatmul.mubr.f32.gmra.mxu0 %v932
        %v1093 = vpop.f32.mrf.mxu0
        %v1094 = vadd.f32 %v1015, %v1093
        %v1095 = vpop.f32.mrf.mxu0
        %1096 = vmatprep.mubr.f32.mxu0 0.0
        %1097 = vmatmul.mubr.f32.gmra.mxu0 %v933
        %v1098 = vpop.f32.mrf.mxu0
        %v1099 = vadd.f32 %v1015, %v1098
        %v1100 = vpop.f32.mrf.mxu0
        %1101 = vmatprep.mubr.f32.mxu0 0.0
        %1102 = vmatmul.mubr.f32.gmra.mxu0 %v934
        %v1103 = vpop.f32.mrf.mxu0
        %v1104 = vadd.f32 %v1015, %v1103
        %v1105 = vpop.f32.mrf.mxu0
        %1106 = vmatprep.mubr.f32.mxu0 0.0
        %1107 = vmatmul.mubr.f32.gmra.mxu0 %v935
        %v1108 = vpop.f32.mrf.mxu0
        %v1109 = vadd.f32 %v1015, %v1108
        %v1110 = vpop.f32.mrf.mxu0
        %1111 = vmatprep.mubr.f32.mxu0 0.0
        %1112 = vmatmul.mubr.f32.gmra.mxu0 %v936
        %v1113 = vpop.f32.mrf.mxu0
        %v1114 = vadd.f32 %v1015, %v1113
        %v1115 = vpop.f32.mrf.mxu0
        %1116 = vmatprep.mubr.f32.mxu0 0.0
        %1117 = vmatmul.mubr.f32.gmra.mxu0 %v937
        %v1118 = vpop.f32.mrf.mxu0
        %v1119 = vadd.f32 %v1015, %v1118
        %v1120 = vpop.f32.mrf.mxu0
        %1121 = vmatprep.mubr.f32.mxu0 0.0
        %1122 = vmatmul.mubr.f32.gmra.mxu0 %v938
        %v1123 = vpop.f32.mrf.mxu0
        %v1124 = vadd.f32 %v1015, %v1123
        %v1125 = vpop.f32.mrf.mxu0
        %1126 = vmatprep.mubr.f32.mxu0 0.0
        %1127 = vmatmul.mubr.f32.gmra.mxu0 %v939
        %v1128 = vpop.f32.mrf.mxu0
        %v1129 = vadd.f32 %v1015, %v1128
        %v1130 = vpop.f32.mrf.mxu0
        %1131 = vmatprep.mubr.f32.mxu0 0.0
        %1132 = vmatmul.mubr.f32.gmra.mxu0 %v940
        %v1133 = vpop.f32.mrf.mxu0
        %v1134 = vadd.f32 %v1015, %v1133
        %v1135 = vpop.f32.mrf.mxu0
        %1136 = vmatprep.mubr.f32.mxu0 0.0
        %1137 = vmatmul.mubr.f32.gmra.mxu0 %v941
        %v1138 = vpop.f32.mrf.mxu0
        %v1139 = vadd.f32 %v1015, %v1138
        %v1140 = vpop.f32.mrf.mxu0
        %1141 = vmatprep.mubr.f32.mxu0 0.0
        %1142 = vmatmul.mubr.f32.gmra.mxu0 %v942
        %v1143 = vpop.f32.mrf.mxu0
        %v1144 = vadd.f32 %v1015, %v1143
        %v1145 = vpop.f32.mrf.mxu0
        %1146 = vmatprep.mubr.f32.mxu0 0.0
        %1147 = vmatmul.mubr.f32.gmra.mxu0 %v943
        %v1148 = vpop.f32.mrf.mxu0
        %v1149 = vadd.f32 %v1015, %v1148
        %v1150 = vpop.f32.mrf.mxu0
        %1151 = vmatprep.mubr.f32.mxu0 0.0
        %1152 = vmatmul.mubr.f32.gmra.mxu0 %v944
        %v1153 = vpop.f32.mrf.mxu0
        %v1154 = vadd.f32 %v1015, %v1153
        %v1155 = vpop.f32.mrf.mxu0
        %1156 = vmatprep.mubr.f32.mxu0 0.0
        %1157 = vmatmul.mubr.f32.gmra.mxu0 %v945
        %v1158 = vpop.f32.mrf.mxu0
        %v1159 = vadd.f32 %v1015, %v1158
        %v1160 = vpop.f32.mrf.mxu0
        %1161 = vmatprep.mubr.f32.mxu0 0.0
        %1162 = vmatmul.mubr.f32.gmra.mxu0 %v946
        %v1163 = vpop.f32.mrf.mxu0
        %v1164 = vadd.f32 %v1015, %v1163
        %v1165 = vpop.f32.mrf.mxu0
        %1166 = vmatprep.mubr.f32.mxu0 0.0
        %1167 = vmatmul.mubr.f32.gmra.mxu0 %v947
        %v1168 = vpop.f32.mrf.mxu0
        %v1169 = vadd.f32 %v1015, %v1168
        %v1170 = vpop.f32.mrf.mxu0
        %1171 = vmatprep.mubr.f32.mxu0 0.0
        %1172 = vmatmul.mubr.f32.gmra.mxu0 %v948
        %v1173 = vpop.f32.mrf.mxu0
        %v1174 = vadd.f32 %v1015, %v1173
        %v1175 = vpop.f32.mrf.mxu0
        %1176 = vmatprep.mubr.f32.mxu0 0.0
        %1177 = vmatmul.mubr.f32.gmra.mxu0 %v949
        %v1178 = vpop.f32.mrf.mxu0
        %v1179 = vadd.f32 %v1015, %v1178
        %v1180 = vpop.f32.mrf.mxu0
        %1181 = vmatprep.mubr.f32.mxu0 0.0
        %1182 = vmatmul.mubr.f32.gmra.mxu0 %v950
        %v1183 = vpop.f32.mrf.mxu0
        %v1184 = vadd.f32 %v1015, %v1183
        %v1185 = vpop.f32.mrf.mxu0
        %1186 = vmatprep.mubr.f32.mxu0 0.0
        %1187 = vmatmul.mubr.f32.gmra.mxu0 %v951
        %v1188 = vpop.f32.mrf.mxu0
        %v1189 = vadd.f32 %v1015, %v1188
        %v1190 = vpop.f32.mrf.mxu0
        %1191 = vmatprep.mubr.f32.mxu0 0.0
        %1192 = vmatmul.mubr.f32.gmra.mxu0 %v952
        %v1193 = vpop.f32.mrf.mxu0
        %v1194 = vadd.f32 %v1015, %v1193
        %v1195 = vpop.f32.mrf.mxu0
        %1196 = vmatprep.mubr.f32.mxu0 0.0
        %1197 = vmatmul.mubr.f32.gmra.mxu0 %v953
        %v1198 = vpop.f32.mrf.mxu0
        %v1199 = vadd.f32 %v1015, %v1198
        %v1200 = vpop.f32.mrf.mxu0
        %1201 = vmatprep.mubr.f32.mxu0 0.0
        %1202 = vmatmul.mubr.f32.gmra.mxu0 %v954
        %v1203 = vpop.f32.mrf.mxu0
        %v1204 = vadd.f32 %v1015, %v1203
        %v1205 = vpop.f32.mrf.mxu0
        %1206 = vmatprep.mubr.f32.mxu0 0.0
        %1207 = vmatmul.mubr.f32.gmra.mxu0 %v955
        %v1208 = vpop.f32.mrf.mxu0
        %v1209 = vadd.f32 %v1015, %v1208
        %v1210 = vpop.f32.mrf.mxu0
        %1211 = vmatprep.mubr.f32.mxu0 0.0
        %1212 = vmatmul.mubr.f32.gmra.mxu0 %v956
        %v1213 = vpop.f32.mrf.mxu0
        %v1214 = vadd.f32 %v1015, %v1213
        %v1215 = vpop.f32.mrf.mxu0
        %1216 = vmatprep.mubr.f32.mxu0 0.0
        %1217 = vmatmul.mubr.f32.gmra.mxu0 %v957
        %v1218 = vpop.f32.mrf.mxu0
        %v1219 = vadd.f32 %v1015, %v1218
        %v1220 = vpop.f32.mrf.mxu0
        %1221 = vmatprep.mubr.f32.mxu0 0.0
        %1222 = vmatmul.mubr.f32.gmra.mxu0 %v958
        %v1223 = vpop.f32.mrf.mxu0
        %v1224 = vadd.f32 %v1015, %v1223
        %v1225 = vpop.f32.mrf.mxu0
        %1226 = vmatprep.mubr.f32.mxu0 0.0
        %1227 = vmatmul.mubr.f32.gmra.mxu0 %v959
        %v1228 = vpop.f32.mrf.mxu0
        %v1229 = vadd.f32 %v1015, %v1228
        %v1230 = vpop.f32.mrf.mxu0
        %1231 = vmatprep.mubr.f32.mxu0 0.0
        %1232 = vmatmul.mubr.f32.gmra.mxu0 %v960
        %v1233 = vpop.f32.mrf.mxu0
        %v1234 = vadd.f32 %v1015, %v1233
        %v1235 = vpop.f32.mrf.mxu0
        %1236 = vmatprep.mubr.f32.mxu0 0.0
        %1237 = vmatmul.mubr.f32.gmra.mxu0 %v961
        %v1238 = vpop.f32.mrf.mxu0
        %v1239 = vadd.f32 %v1015, %v1238
        %v1240 = vpop.f32.mrf.mxu0
        %1241 = vmatprep.mubr.f32.mxu0 0.0
        %1242 = vmatmul.mubr.f32.gmra.mxu0 %v962
        %v1243 = vpop.f32.mrf.mxu0
        %v1244 = vadd.f32 %v1015, %v1243
        %v1245 = vpop.f32.mrf.mxu0
        %1246 = vmatprep.mubr.f32.mxu0 0.0
        %1247 = vmatmul.mubr.f32.gmra.mxu0 %v963
        %v1248 = vpop.f32.mrf.mxu0
        %v1249 = vadd.f32 %v1015, %v1248
        %v1250 = vpop.f32.mrf.mxu0
        %1251 = vmatprep.mubr.f32.mxu0 0.0
        %1252 = vmatmul.mubr.f32.gmra.mxu0 %v964
        %v1253 = vpop.f32.mrf.mxu0
        %v1254 = vadd.f32 %v1015, %v1253
        %v1255 = vpop.f32.mrf.mxu0
        %1256 = vmatprep.mubr.f32.mxu0 0.0
        %1257 = vmatmul.mubr.f32.gmra.mxu0 %v965
        %v1258 = vpop.f32.mrf.mxu0
        %v1259 = vadd.f32 %v1015, %v1258
        %v1260 = vpop.f32.mrf.mxu0
        %1261 = vmatprep.mubr.f32.mxu0 0.0
        %1262 = vmatmul.mubr.f32.gmra.mxu0 %v966
        %v1263 = vpop.f32.mrf.mxu0
        %v1264 = vadd.f32 %v1015, %v1263
        %v1265 = vpop.f32.mrf.mxu0
        %1266 = vmatprep.mubr.f32.mxu0 0.0
        %1267 = vmatmul.mubr.f32.gmra.mxu0 %v967
        %v1268 = vpop.f32.mrf.mxu0
        %v1269 = vadd.f32 %v1015, %v1268
        %v1270 = vpop.f32.mrf.mxu0
        %1271 = vmatprep.mubr.f32.mxu0 0.0
        %1272 = vmatmul.mubr.f32.gmra.mxu0 %v968
        %v1273 = vpop.f32.mrf.mxu0
        %v1274 = vadd.f32 %v1015, %v1273
        %v1275 = vpop.f32.mrf.mxu0
        %1276 = vmatprep.mubr.f32.mxu0 0.0
        %1277 = vmatmul.mubr.f32.gmra.mxu0 %v969
        %v1278 = vpop.f32.mrf.mxu0
        %v1279 = vadd.f32 %v1015, %v1278
        %v1280 = vpop.f32.mrf.mxu0
        %1281 = vmatprep.mubr.f32.mxu0 0.0
        %1282 = vmatmul.mubr.f32.gmra.mxu0 %v970
        %v1283 = vpop.f32.mrf.mxu0
        %v1284 = vadd.f32 %v1015, %v1283
        %v1285 = vpop.f32.mrf.mxu0
        %1286 = vmatprep.mubr.f32.mxu0 0.0
        %1287 = vmatmul.mubr.f32.gmra.mxu0 %v971
        %v1288 = vpop.f32.mrf.mxu0
        %v1289 = vadd.f32 %v1015, %v1288
        %v1290 = vpop.f32.mrf.mxu0
        %1291 = vmatprep.mubr.f32.mxu0 0.0
        %1292 = vmatmul.mubr.f32.gmra.mxu0 %v972
        %v1293 = vpop.f32.mrf.mxu0
        %v1294 = vadd.f32 %v1015, %v1293
        %v1295 = vpop.f32.mrf.mxu0
        %1296 = vmatprep.mubr.f32.mxu0 0.0
        %1297 = vmatmul.mubr.f32.gmra.mxu0 %v973
        %v1298 = vpop.f32.mrf.mxu0
        %v1299 = vadd.f32 %v1015, %v1298
        %v1300 = vpop.f32.mrf.mxu0
        %1301 = vmatprep.mubr.f32.mxu0 0.0
        %1302 = vmatmul.mubr.f32.gmra.mxu0 %v974
        %v1303 = vpop.f32.mrf.mxu0
        %v1304 = vadd.f32 %v1015, %v1303
        %v1305 = vpop.f32.mrf.mxu0
        %1306 = vmatprep.mubr.f32.mxu0 0.0
        %1307 = vmatmul.mubr.f32.gmra.mxu0 %v975
        %v1308 = vpop.f32.mrf.mxu0
        %v1309 = vadd.f32 %v1015, %v1308
        %v1310 = vpop.f32.mrf.mxu0
        %1311 = vmatprep.mubr.f32.mxu0 0.0
        %1312 = vmatmul.mubr.f32.gmra.mxu0 %v976
        %v1313 = vpop.f32.mrf.mxu0
        %v1314 = vadd.f32 %v1015, %v1313
        %v1315 = vpop.f32.mrf.mxu0
        %1316 = vmatprep.mubr.f32.mxu0 0.0
        %1317 = vmatmul.mubr.f32.gmra.mxu0 %v977
        %v1318 = vpop.f32.mrf.mxu0
        %v1319 = vadd.f32 %v1015, %v1318
        %v1320 = vpop.f32.mrf.mxu0
        %1321 = vmatprep.mubr.f32.mxu0 0.0
        %1322 = vmatmul.mubr.f32.gmra.mxu0 %v978
        %v1323 = vpop.f32.mrf.mxu0
        %v1324 = vadd.f32 %v1015, %v1323
        %v1325 = vpop.f32.mrf.mxu0
        %1326 = vmatprep.mubr.f32.mxu0 0.0
        %1327 = vmatmul.mubr.f32.gmra.mxu0 %v979
        %v1328 = vpop.f32.mrf.mxu0
        %v1329 = vadd.f32 %v1015, %v1328
        %v1330 = vpop.f32.mrf.mxu0
        %1331 = vmatprep.mubr.f32.mxu0 0.0
        %1332 = vmatmul.mubr.f32.gmra.mxu0 %v980
        %v1333 = vpop.f32.mrf.mxu0
        %v1334 = vadd.f32 %v1015, %v1333
        %v1335 = vpop.f32.mrf.mxu0
        %1336 = vmatprep.mubr.f32.mxu0 0.0
        %1337 = vmatmul.mubr.f32.gmra.mxu0 %v981
        %v1338 = vpop.f32.mrf.mxu0
        %v1339 = vadd.f32 %v1015, %v1338
        %v1340 = vpop.f32.mrf.mxu0
        %1341 = vmatprep.mubr.f32.mxu0 0.0
        %1342 = vmatmul.mubr.f32.gmra.mxu0 %v982
        %v1343 = vpop.f32.mrf.mxu0
        %v1344 = vadd.f32 %v1015, %v1343
        %v1345 = vpop.f32.mrf.mxu0
        %1346 = vmatprep.mubr.f32.mxu0 0.0
        %1347 = vmatmul.mubr.f32.gmra.mxu0 %v983
        %v1348 = vpop.f32.mrf.mxu0
        %v1349 = vadd.f32 %v1015, %v1348
        %v1350 = vpop.f32.mrf.mxu0
        %1351 = vmatprep.mubr.f32.mxu0 0.0
        %1352 = vmatmul.mubr.f32.gmra.mxu0 %v984
        %v1353 = vpop.f32.mrf.mxu0
        %v1354 = vadd.f32 %v1015, %v1353
        %v1355 = vpop.f32.mrf.mxu0
        %1356 = vmatprep.mubr.f32.mxu0 0.0
        %1357 = vmatmul.mubr.f32.gmra.mxu0 %v985
        %v1358 = vpop.f32.mrf.mxu0
        %v1359 = vadd.f32 %v1015, %v1358
        %v1360 = vpop.f32.mrf.mxu0
        %1361 = vmatprep.mubr.f32.mxu0 0.0
        %1362 = vmatmul.mubr.f32.gmra.mxu0 %v986
        %v1363 = vpop.f32.mrf.mxu0
        %v1364 = vadd.f32 %v1015, %v1363
        %v1365 = vpop.f32.mrf.mxu0
        %1366 = vmatprep.mubr.f32.mxu0 0.0
        %1367 = vmatmul.mubr.f32.gmra.mxu0 %v987
        %v1368 = vpop.f32.mrf.mxu0
        %v1369 = vadd.f32 %v1015, %v1368
        %v1370 = vpop.f32.mrf.mxu0
        %1371 = vmatprep.mubr.f32.mxu0 0.0
        %1372 = vmatmul.mubr.f32.gmra.mxu0 %v988
        %v1373 = vpop.f32.mrf.mxu0
        %v1374 = vadd.f32 %v1015, %v1373
        %v1375 = vpop.f32.mrf.mxu0
        %1376 = vmatprep.mubr.f32.mxu0 0.0
        %1377 = vmatmul.mubr.f32.gmra.mxu0 %v989
        %v1378 = vpop.f32.mrf.mxu0
        %v1379 = vadd.f32 %v1015, %v1378
        %v1380 = vpop.f32.mrf.mxu0
        %1381 = vmatprep.mubr.f32.mxu0 0.0
        %1382 = vmatmul.mubr.f32.gmra.mxu0 %v990
        %v1383 = vpop.f32.mrf.mxu0
        %v1384 = vadd.f32 %v1015, %v1383
        %v1385 = vpop.f32.mrf.mxu0
        %1386 = vmatprep.mubr.f32.mxu0 0.0
        %1387 = vmatmul.mubr.f32.gmra.mxu0 %v991
        %v1388 = vpop.f32.mrf.mxu0
        %v1389 = vadd.f32 %v1015, %v1388
        %v1390 = vpop.f32.mrf.mxu0
        %1391 = vmatprep.mubr.f32.mxu0 0.0
        %1392 = vmatmul.mubr.f32.gmra.mxu0 %v992
        %v1393 = vpop.f32.mrf.mxu0
        %v1394 = vadd.f32 %v1015, %v1393
        %v1395 = vpop.f32.mrf.mxu0
        %1396 = vmatprep.mubr.f32.mxu0 0.0
        %1397 = vmatmul.mubr.f32.gmra.mxu0 %v993
        %v1398 = vpop.f32.mrf.mxu0
        %v1399 = vadd.f32 %v1015, %v1398
        %v1400 = vpop.f32.mrf.mxu0
        %1401 = vdwg.mxu0
        %v1402 = vtanh.pop %v1084
        %v1403 = vtanh.pop %v1089
        %v1404 = vtanh.pop %v1094
        %v1405 = vtanh.pop %v1099
        %v1406 = vtanh.pop %v1104
        %v1407 = vtanh.pop %v1109
        %v1408 = vtanh.pop %v1114
        %v1409 = vtanh.pop %v1119
        %v1410 = vtanh.pop %v1124
        %v1411 = vtanh.pop %v1129
        %v1412 = vtanh.pop %v1134
        %v1413 = vtanh.pop %v1139
        %v1414 = vtanh.pop %v1144
        %v1415 = vtanh.pop %v1149
        %v1416 = vtanh.pop %v1154
        %v1417 = vtanh.pop %v1159
        %v1418 = vtanh.pop %v1164
        %v1419 = vtanh.pop %v1169
        %v1420 = vtanh.pop %v1174
        %v1421 = vtanh.pop %v1179
        %v1422 = vtanh.pop %v1184
        %v1423 = vtanh.pop %v1189
        %v1424 = vtanh.pop %v1194
        %v1425 = vtanh.pop %v1199
        %v1426 = vtanh.pop %v1204
        %v1427 = vtanh.pop %v1209
        %v1428 = vtanh.pop %v1214
        %v1429 = vtanh.pop %v1219
        %v1430 = vtanh.pop %v1224
        %v1431 = vtanh.pop %v1229
        %v1432 = vtanh.pop %v1234
        %v1433 = vtanh.pop %v1239
        %v1434 = vtanh.pop %v1244
        %v1435 = vtanh.pop %v1249
        %v1436 = vtanh.pop %v1254
        %v1437 = vtanh.pop %v1259
        %v1438 = vtanh.pop %v1264
        %v1439 = vtanh.pop %v1269
        %v1440 = vtanh.pop %v1274
        %v1441 = vtanh.pop %v1279
        %v1442 = vtanh.pop %v1284
        %v1443 = vtanh.pop %v1289
        %v1444 = vtanh.pop %v1294
        %v1445 = vtanh.pop %v1299
        %v1446 = vtanh.pop %v1304
        %v1447 = vtanh.pop %v1309
        %v1448 = vtanh.pop %v1314
        %v1449 = vtanh.pop %v1319
        %v1450 = vtanh.pop %v1324
        %v1451 = vtanh.pop %v1329
        %v1452 = vtanh.pop %v1334
        %v1453 = vtanh.pop %v1339
        %v1454 = vtanh.pop %v1344
        %v1455 = vtanh.pop %v1349
        %v1456 = vtanh.pop %v1354
        %v1457 = vtanh.pop %v1359
        %v1458 = vtanh.pop %v1364
        %v1459 = vtanh.pop %v1369
        %v1460 = vtanh.pop %v1374
        %v1461 = vtanh.pop %v1379
        %v1462 = vtanh.pop %v1384
        %v1463 = vtanh.pop %v1389
        %v1464 = vtanh.pop %v1394
        %v1465 = vtanh.pop %v1399
        %v1466 = vld [vmem:[%s5] sm:$0xff]
        %v1467 = vld [vmem:[%s5 + $0x8] sm:$0xff]
        %v1468 = vld [vmem:[%s5 + $0x10] sm:$0xff]
        %v1469 = vld [vmem:[%s5 + $0x18] sm:$0xff]
        %v1470 = vld [vmem:[%s5 + $0x20] sm:$0xff]
        %v1471 = vld [vmem:[%s5 + $0x28] sm:$0xff]
        %v1472 = vld [vmem:[%s5 + $0x30] sm:$0xff]
        %v1473 = vld [vmem:[%s5 + $0x38] sm:$0xff]
        %v1474 = vld [vmem:[%s5 + $0x40] sm:$0xff]
        %v1475 = vld [vmem:[%s5 + $0x48] sm:$0xff]
        %v1476 = vld [vmem:[%s5 + $0x50] sm:$0xff]
        %v1477 = vld [vmem:[%s5 + $0x58] sm:$0xff]
        %v1478 = vld [vmem:[%s5 + $0x60] sm:$0xff]
        %v1479 = vld [vmem:[%s5 + $0x68] sm:$0xff]
        %v1480 = vld [vmem:[%s5 + $0x70] sm:$0xff]
        %v1481 = vld [vmem:[%s5 + $0x78] sm:$0xff]
        %v1482 = vld [vmem:[%s6] sm:$0x1]
        %v1484 = vlaneseq
        %v1485 = vshrl.u32 %v1484, 7
        %v1486 = vsub.s32 0, %v1485
        %v1487 = vrot.slane %v1482, %v1486
        %1489 = vmatprep.subr.mxu0 0.0
        %1490 = vmatpush1.msra.mxu0 %v1481
        %1491 = vmatprep.subr.mxu0 0.0
        %1492 = vmatpush1.msra.mxu0 %v1480
        %1493 = vmatprep.subr.mxu0 0.0
        %1494 = vmatpush1.msra.mxu0 %v1479
        %1495 = vmatprep.subr.mxu0 0.0
        %1496 = vmatpush1.msra.mxu0 %v1478
        %1497 = vmatprep.subr.mxu0 0.0
        %1498 = vmatpush1.msra.mxu0 %v1477
        %1499 = vmatprep.subr.mxu0 0.0
        %1500 = vmatpush1.msra.mxu0 %v1476
        %1501 = vmatprep.subr.mxu0 0.0
        %1502 = vmatpush1.msra.mxu0 %v1475
        %1503 = vmatprep.subr.mxu0 0.0
        %1504 = vmatpush1.msra.mxu0 %v1474
        %1505 = vmatprep.subr.mxu0 0.0
        %1506 = vmatpush1.msra.mxu0 %v1473
        %1507 = vmatprep.subr.mxu0 0.0
        %1508 = vmatpush1.msra.mxu0 %v1472
        %1509 = vmatprep.subr.mxu0 0.0
        %1510 = vmatpush1.msra.mxu0 %v1471
        %1511 = vmatprep.subr.mxu0 0.0
        %1512 = vmatpush1.msra.mxu0 %v1470
        %1513 = vmatprep.subr.mxu0 0.0
        %1514 = vmatpush1.msra.mxu0 %v1469
        %1515 = vmatprep.subr.mxu0 0.0
        %1516 = vmatpush1.msra.mxu0 %v1468
        %1517 = vmatprep.subr.mxu0 0.0
        %1518 = vmatpush1.msra.mxu0 %v1467
        %1519 = vmatprep.subr.mxu0 0.0
        %1520 = vmatpush1.msra.mxu0 %v1466
        %1521 = vmatprep.subr.mxu0 0.0
        %1522 = vmatpush2.msra.mxu0 0.0
        %1523 = vmatprep.subr.mxu0 0.0
        %1524 = vmatpush2.msra.mxu0 0.0
        %1525 = vmatprep.subr.mxu0 0.0
        %1526 = vmatpush2.msra.mxu0 0.0
        %1527 = vmatprep.subr.mxu0 0.0
        %1528 = vmatpush2.msra.mxu0 0.0
        %1529 = vmatprep.subr.mxu0 0.0
        %1530 = vmatpush2.msra.mxu0 0.0
        %1531 = vmatprep.subr.mxu0 0.0
        %1532 = vmatpush2.msra.mxu0 0.0
        %1533 = vmatprep.subr.mxu0 0.0
        %1534 = vmatpush2.msra.mxu0 0.0
        %1535 = vmatprep.subr.mxu0 0.0
        %1536 = vmatpush2.msra.mxu0 0.0
        %1537 = vmatprep.subr.mxu0 0.0
        %1538 = vmatpush2.msra.mxu0 0.0
        %1539 = vmatprep.subr.mxu0 0.0
        %1540 = vmatpush2.msra.mxu0 0.0
        %1541 = vmatprep.subr.mxu0 0.0
        %1542 = vmatpush2.msra.mxu0 0.0
        %1543 = vmatprep.subr.mxu0 0.0
        %1544 = vmatpush2.msra.mxu0 0.0
        %1545 = vmatprep.subr.mxu0 0.0
        %1546 = vmatpush2.msra.mxu0 0.0
        %1547 = vmatprep.subr.mxu0 0.0
        %1548 = vmatpush2.msra.mxu0 0.0
        %1549 = vmatprep.subr.mxu0 0.0
        %1550 = vmatpush2.msra.mxu0 0.0
        %1551 = vmatprep.subr.mxu0 0.0
        %1552 = vmatpush2.msra.mxu0 0.0
        %1553 = vmatprep.mubr.f32.mxu0 0.0
        %1554 = vmatmul.mubr.f32.gmra.mxu0 %v1402
        %v1555 = vpop.f32.mrf.mxu0
        %v1556 = vadd.f32 %v1487, %v1555
        %v1557 = vpop.f32.mrf.mxu0
        %1558 = vmatprep.mubr.f32.mxu0 0.0
        %1559 = vmatmul.mubr.f32.gmra.mxu0 %v1403
        %v1560 = vpop.f32.mrf.mxu0
        %v1561 = vadd.f32 %v1487, %v1560
        %v1562 = vpop.f32.mrf.mxu0
        %1563 = vmatprep.mubr.f32.mxu0 0.0
        %1564 = vmatmul.mubr.f32.gmra.mxu0 %v1404
        %v1565 = vpop.f32.mrf.mxu0
        %v1566 = vadd.f32 %v1487, %v1565
        %v1567 = vpop.f32.mrf.mxu0
        %1568 = vmatprep.mubr.f32.mxu0 0.0
        %1569 = vmatmul.mubr.f32.gmra.mxu0 %v1405
        %v1570 = vpop.f32.mrf.mxu0
        %v1571 = vadd.f32 %v1487, %v1570
        %v1572 = vpop.f32.mrf.mxu0
        %1573 = vmatprep.mubr.f32.mxu0 0.0
        %1574 = vmatmul.mubr.f32.gmra.mxu0 %v1406
        %v1575 = vpop.f32.mrf.mxu0
        %v1576 = vadd.f32 %v1487, %v1575
        %v1577 = vpop.f32.mrf.mxu0
        %1578 = vmatprep.mubr.f32.mxu0 0.0
        %1579 = vmatmul.mubr.f32.gmra.mxu0 %v1407
        %v1580 = vpop.f32.mrf.mxu0
        %v1581 = vadd.f32 %v1487, %v1580
        %v1582 = vpop.f32.mrf.mxu0
        %1583 = vmatprep.mubr.f32.mxu0 0.0
        %1584 = vmatmul.mubr.f32.gmra.mxu0 %v1408
        %v1585 = vpop.f32.mrf.mxu0
        %v1586 = vadd.f32 %v1487, %v1585
        %v1587 = vpop.f32.mrf.mxu0
        %1588 = vmatprep.mubr.f32.mxu0 0.0
        %1589 = vmatmul.mubr.f32.gmra.mxu0 %v1409
        %v1590 = vpop.f32.mrf.mxu0
        %v1591 = vadd.f32 %v1487, %v1590
        %v1592 = vpop.f32.mrf.mxu0
        %1593 = vmatprep.mubr.f32.mxu0 0.0
        %1594 = vmatmul.mubr.f32.gmra.mxu0 %v1410
        %v1595 = vpop.f32.mrf.mxu0
        %v1596 = vadd.f32 %v1487, %v1595
        %v1597 = vpop.f32.mrf.mxu0
        %1598 = vmatprep.mubr.f32.mxu0 0.0
        %1599 = vmatmul.mubr.f32.gmra.mxu0 %v1411
        %v1600 = vpop.f32.mrf.mxu0
        %v1601 = vadd.f32 %v1487, %v1600
        %v1602 = vpop.f32.mrf.mxu0
        %1603 = vmatprep.mubr.f32.mxu0 0.0
        %1604 = vmatmul.mubr.f32.gmra.mxu0 %v1412
        %v1605 = vpop.f32.mrf.mxu0
        %v1606 = vadd.f32 %v1487, %v1605
        %v1607 = vpop.f32.mrf.mxu0
        %1608 = vmatprep.mubr.f32.mxu0 0.0
        %1609 = vmatmul.mubr.f32.gmra.mxu0 %v1413
        %v1610 = vpop.f32.mrf.mxu0
        %v1611 = vadd.f32 %v1487, %v1610
        %v1612 = vpop.f32.mrf.mxu0
        %1613 = vmatprep.mubr.f32.mxu0 0.0
        %1614 = vmatmul.mubr.f32.gmra.mxu0 %v1414
        %v1615 = vpop.f32.mrf.mxu0
        %v1616 = vadd.f32 %v1487, %v1615
        %v1617 = vpop.f32.mrf.mxu0
        %1618 = vmatprep.mubr.f32.mxu0 0.0
        %1619 = vmatmul.mubr.f32.gmra.mxu0 %v1415
        %v1620 = vpop.f32.mrf.mxu0
        %v1621 = vadd.f32 %v1487, %v1620
        %v1622 = vpop.f32.mrf.mxu0
        %1623 = vmatprep.mubr.f32.mxu0 0.0
        %1624 = vmatmul.mubr.f32.gmra.mxu0 %v1416
        %v1625 = vpop.f32.mrf.mxu0
        %v1626 = vadd.f32 %v1487, %v1625
        %v1627 = vpop.f32.mrf.mxu0
        %1628 = vmatprep.mubr.f32.mxu0 0.0
        %1629 = vmatmul.mubr.f32.gmra.mxu0 %v1417
        %v1630 = vpop.f32.mrf.mxu0
        %v1631 = vadd.f32 %v1487, %v1630
        %v1632 = vpop.f32.mrf.mxu0
        %1633 = vmatprep.mubr.f32.mxu0 0.0
        %1634 = vmatmul.mubr.f32.gmra.mxu0 %v1418
        %v1635 = vpop.f32.mrf.mxu0
        %v1636 = vadd.f32 %v1487, %v1635
        %v1637 = vpop.f32.mrf.mxu0
        %1638 = vmatprep.mubr.f32.mxu0 0.0
        %1639 = vmatmul.mubr.f32.gmra.mxu0 %v1419
        %v1640 = vpop.f32.mrf.mxu0
        %v1641 = vadd.f32 %v1487, %v1640
        %v1642 = vpop.f32.mrf.mxu0
        %1643 = vmatprep.mubr.f32.mxu0 0.0
        %1644 = vmatmul.mubr.f32.gmra.mxu0 %v1420
        %v1645 = vpop.f32.mrf.mxu0
        %v1646 = vadd.f32 %v1487, %v1645
        %v1647 = vpop.f32.mrf.mxu0
        %1648 = vmatprep.mubr.f32.mxu0 0.0
        %1649 = vmatmul.mubr.f32.gmra.mxu0 %v1421
        %v1650 = vpop.f32.mrf.mxu0
        %v1651 = vadd.f32 %v1487, %v1650
        %v1652 = vpop.f32.mrf.mxu0
        %1653 = vmatprep.mubr.f32.mxu0 0.0
        %1654 = vmatmul.mubr.f32.gmra.mxu0 %v1422
        %v1655 = vpop.f32.mrf.mxu0
        %v1656 = vadd.f32 %v1487, %v1655
        %v1657 = vpop.f32.mrf.mxu0
        %1658 = vmatprep.mubr.f32.mxu0 0.0
        %1659 = vmatmul.mubr.f32.gmra.mxu0 %v1423
        %v1660 = vpop.f32.mrf.mxu0
        %v1661 = vadd.f32 %v1487, %v1660
        %v1662 = vpop.f32.mrf.mxu0
        %1663 = vmatprep.mubr.f32.mxu0 0.0
        %1664 = vmatmul.mubr.f32.gmra.mxu0 %v1424
        %v1665 = vpop.f32.mrf.mxu0
        %v1666 = vadd.f32 %v1487, %v1665
        %v1667 = vpop.f32.mrf.mxu0
        %1668 = vmatprep.mubr.f32.mxu0 0.0
        %1669 = vmatmul.mubr.f32.gmra.mxu0 %v1425
        %v1670 = vpop.f32.mrf.mxu0
        %v1671 = vadd.f32 %v1487, %v1670
        %v1672 = vpop.f32.mrf.mxu0
        %1673 = vmatprep.mubr.f32.mxu0 0.0
        %1674 = vmatmul.mubr.f32.gmra.mxu0 %v1426
        %v1675 = vpop.f32.mrf.mxu0
        %v1676 = vadd.f32 %v1487, %v1675
        %v1677 = vpop.f32.mrf.mxu0
        %1678 = vmatprep.mubr.f32.mxu0 0.0
        %1679 = vmatmul.mubr.f32.gmra.mxu0 %v1427
        %v1680 = vpop.f32.mrf.mxu0
        %v1681 = vadd.f32 %v1487, %v1680
        %v1682 = vpop.f32.mrf.mxu0
        %1683 = vmatprep.mubr.f32.mxu0 0.0
        %1684 = vmatmul.mubr.f32.gmra.mxu0 %v1428
        %v1685 = vpop.f32.mrf.mxu0
        %v1686 = vadd.f32 %v1487, %v1685
        %v1687 = vpop.f32.mrf.mxu0
        %1688 = vmatprep.mubr.f32.mxu0 0.0
        %1689 = vmatmul.mubr.f32.gmra.mxu0 %v1429
        %v1690 = vpop.f32.mrf.mxu0
        %v1691 = vadd.f32 %v1487, %v1690
        %v1692 = vpop.f32.mrf.mxu0
        %1693 = vmatprep.mubr.f32.mxu0 0.0
        %1694 = vmatmul.mubr.f32.gmra.mxu0 %v1430
        %v1695 = vpop.f32.mrf.mxu0
        %v1696 = vadd.f32 %v1487, %v1695
        %v1697 = vpop.f32.mrf.mxu0
        %1698 = vmatprep.mubr.f32.mxu0 0.0
        %1699 = vmatmul.mubr.f32.gmra.mxu0 %v1431
        %v1700 = vpop.f32.mrf.mxu0
        %v1701 = vadd.f32 %v1487, %v1700
        %v1702 = vpop.f32.mrf.mxu0
        %1703 = vmatprep.mubr.f32.mxu0 0.0
        %1704 = vmatmul.mubr.f32.gmra.mxu0 %v1432
        %v1705 = vpop.f32.mrf.mxu0
        %v1706 = vadd.f32 %v1487, %v1705
        %v1707 = vpop.f32.mrf.mxu0
        %1708 = vmatprep.mubr.f32.mxu0 0.0
        %1709 = vmatmul.mubr.f32.gmra.mxu0 %v1433
        %v1710 = vpop.f32.mrf.mxu0
        %v1711 = vadd.f32 %v1487, %v1710
        %v1712 = vpop.f32.mrf.mxu0
        %1713 = vmatprep.mubr.f32.mxu0 0.0
        %1714 = vmatmul.mubr.f32.gmra.mxu0 %v1434
        %v1715 = vpop.f32.mrf.mxu0
        %v1716 = vadd.f32 %v1487, %v1715
        %v1717 = vpop.f32.mrf.mxu0
        %1718 = vmatprep.mubr.f32.mxu0 0.0
        %1719 = vmatmul.mubr.f32.gmra.mxu0 %v1435
        %v1720 = vpop.f32.mrf.mxu0
        %v1721 = vadd.f32 %v1487, %v1720
        %v1722 = vpop.f32.mrf.mxu0
        %1723 = vmatprep.mubr.f32.mxu0 0.0
        %1724 = vmatmul.mubr.f32.gmra.mxu0 %v1436
        %v1725 = vpop.f32.mrf.mxu0
        %v1726 = vadd.f32 %v1487, %v1725
        %v1727 = vpop.f32.mrf.mxu0
        %1728 = vmatprep.mubr.f32.mxu0 0.0
        %1729 = vmatmul.mubr.f32.gmra.mxu0 %v1437
        %v1730 = vpop.f32.mrf.mxu0
        %v1731 = vadd.f32 %v1487, %v1730
        %v1732 = vpop.f32.mrf.mxu0
        %1733 = vmatprep.mubr.f32.mxu0 0.0
        %1734 = vmatmul.mubr.f32.gmra.mxu0 %v1438
        %v1735 = vpop.f32.mrf.mxu0
        %v1736 = vadd.f32 %v1487, %v1735
        %v1737 = vpop.f32.mrf.mxu0
        %1738 = vmatprep.mubr.f32.mxu0 0.0
        %1739 = vmatmul.mubr.f32.gmra.mxu0 %v1439
        %v1740 = vpop.f32.mrf.mxu0
        %v1741 = vadd.f32 %v1487, %v1740
        %v1742 = vpop.f32.mrf.mxu0
        %1743 = vmatprep.mubr.f32.mxu0 0.0
        %1744 = vmatmul.mubr.f32.gmra.mxu0 %v1440
        %v1745 = vpop.f32.mrf.mxu0
        %v1746 = vadd.f32 %v1487, %v1745
        %v1747 = vpop.f32.mrf.mxu0
        %1748 = vmatprep.mubr.f32.mxu0 0.0
        %1749 = vmatmul.mubr.f32.gmra.mxu0 %v1441
        %v1750 = vpop.f32.mrf.mxu0
        %v1751 = vadd.f32 %v1487, %v1750
        %v1752 = vpop.f32.mrf.mxu0
        %1753 = vmatprep.mubr.f32.mxu0 0.0
        %1754 = vmatmul.mubr.f32.gmra.mxu0 %v1442
        %v1755 = vpop.f32.mrf.mxu0
        %v1756 = vadd.f32 %v1487, %v1755
        %v1757 = vpop.f32.mrf.mxu0
        %1758 = vmatprep.mubr.f32.mxu0 0.0
        %1759 = vmatmul.mubr.f32.gmra.mxu0 %v1443
        %v1760 = vpop.f32.mrf.mxu0
        %v1761 = vadd.f32 %v1487, %v1760
        %v1762 = vpop.f32.mrf.mxu0
        %1763 = vmatprep.mubr.f32.mxu0 0.0
        %1764 = vmatmul.mubr.f32.gmra.mxu0 %v1444
        %v1765 = vpop.f32.mrf.mxu0
        %v1766 = vadd.f32 %v1487, %v1765
        %v1767 = vpop.f32.mrf.mxu0
        %1768 = vmatprep.mubr.f32.mxu0 0.0
        %1769 = vmatmul.mubr.f32.gmra.mxu0 %v1445
        %v1770 = vpop.f32.mrf.mxu0
        %v1771 = vadd.f32 %v1487, %v1770
        %v1772 = vpop.f32.mrf.mxu0
        %1773 = vmatprep.mubr.f32.mxu0 0.0
        %1774 = vmatmul.mubr.f32.gmra.mxu0 %v1446
        %v1775 = vpop.f32.mrf.mxu0
        %v1776 = vadd.f32 %v1487, %v1775
        %v1777 = vpop.f32.mrf.mxu0
        %1778 = vmatprep.mubr.f32.mxu0 0.0
        %1779 = vmatmul.mubr.f32.gmra.mxu0 %v1447
        %v1780 = vpop.f32.mrf.mxu0
        %v1781 = vadd.f32 %v1487, %v1780
        %v1782 = vpop.f32.mrf.mxu0
        %1783 = vmatprep.mubr.f32.mxu0 0.0
        %1784 = vmatmul.mubr.f32.gmra.mxu0 %v1448
        %v1785 = vpop.f32.mrf.mxu0
        %v1786 = vadd.f32 %v1487, %v1785
        %v1787 = vpop.f32.mrf.mxu0
        %1788 = vmatprep.mubr.f32.mxu0 0.0
        %1789 = vmatmul.mubr.f32.gmra.mxu0 %v1449
        %v1790 = vpop.f32.mrf.mxu0
        %v1791 = vadd.f32 %v1487, %v1790
        %v1792 = vpop.f32.mrf.mxu0
        %1793 = vmatprep.mubr.f32.mxu0 0.0
        %1794 = vmatmul.mubr.f32.gmra.mxu0 %v1450
        %v1795 = vpop.f32.mrf.mxu0
        %v1796 = vadd.f32 %v1487, %v1795
        %v1797 = vpop.f32.mrf.mxu0
        %1798 = vmatprep.mubr.f32.mxu0 0.0
        %1799 = vmatmul.mubr.f32.gmra.mxu0 %v1451
        %v1800 = vpop.f32.mrf.mxu0
        %v1801 = vadd.f32 %v1487, %v1800
        %v1802 = vpop.f32.mrf.mxu0
        %1803 = vmatprep.mubr.f32.mxu0 0.0
        %1804 = vmatmul.mubr.f32.gmra.mxu0 %v1452
        %v1805 = vpop.f32.mrf.mxu0
        %v1806 = vadd.f32 %v1487, %v1805
        %v1807 = vpop.f32.mrf.mxu0
        %1808 = vmatprep.mubr.f32.mxu0 0.0
        %1809 = vmatmul.mubr.f32.gmra.mxu0 %v1453
        %v1810 = vpop.f32.mrf.mxu0
        %v1811 = vadd.f32 %v1487, %v1810
        %v1812 = vpop.f32.mrf.mxu0
        %1813 = vmatprep.mubr.f32.mxu0 0.0
        %1814 = vmatmul.mubr.f32.gmra.mxu0 %v1454
        %v1815 = vpop.f32.mrf.mxu0
        %v1816 = vadd.f32 %v1487, %v1815
        %v1817 = vpop.f32.mrf.mxu0
        %1818 = vmatprep.mubr.f32.mxu0 0.0
        %1819 = vmatmul.mubr.f32.gmra.mxu0 %v1455
        %v1820 = vpop.f32.mrf.mxu0
        %v1821 = vadd.f32 %v1487, %v1820
        %v1822 = vpop.f32.mrf.mxu0
        %1823 = vmatprep.mubr.f32.mxu0 0.0
        %1824 = vmatmul.mubr.f32.gmra.mxu0 %v1456
        %v1825 = vpop.f32.mrf.mxu0
        %v1826 = vadd.f32 %v1487, %v1825
        %v1827 = vpop.f32.mrf.mxu0
        %1828 = vmatprep.mubr.f32.mxu0 0.0
        %1829 = vmatmul.mubr.f32.gmra.mxu0 %v1457
        %v1830 = vpop.f32.mrf.mxu0
        %v1831 = vadd.f32 %v1487, %v1830
        %v1832 = vpop.f32.mrf.mxu0
        %1833 = vmatprep.mubr.f32.mxu0 0.0
        %1834 = vmatmul.mubr.f32.gmra.mxu0 %v1458
        %v1835 = vpop.f32.mrf.mxu0
        %v1836 = vadd.f32 %v1487, %v1835
        %v1837 = vpop.f32.mrf.mxu0
        %1838 = vmatprep.mubr.f32.mxu0 0.0
        %1839 = vmatmul.mubr.f32.gmra.mxu0 %v1459
        %v1840 = vpop.f32.mrf.mxu0
        %v1841 = vadd.f32 %v1487, %v1840
        %v1842 = vpop.f32.mrf.mxu0
        %1843 = vmatprep.mubr.f32.mxu0 0.0
        %1844 = vmatmul.mubr.f32.gmra.mxu0 %v1460
        %v1845 = vpop.f32.mrf.mxu0
        %v1846 = vadd.f32 %v1487, %v1845
        %v1847 = vpop.f32.mrf.mxu0
        %1848 = vmatprep.mubr.f32.mxu0 0.0
        %1849 = vmatmul.mubr.f32.gmra.mxu0 %v1461
        %v1850 = vpop.f32.mrf.mxu0
        %v1851 = vadd.f32 %v1487, %v1850
        %v1852 = vpop.f32.mrf.mxu0
        %1853 = vmatprep.mubr.f32.mxu0 0.0
        %1854 = vmatmul.mubr.f32.gmra.mxu0 %v1462
        %v1855 = vpop.f32.mrf.mxu0
        %v1856 = vadd.f32 %v1487, %v1855
        %v1857 = vpop.f32.mrf.mxu0
        %1858 = vmatprep.mubr.f32.mxu0 0.0
        %1859 = vmatmul.mubr.f32.gmra.mxu0 %v1463
        %v1860 = vpop.f32.mrf.mxu0
        %v1861 = vadd.f32 %v1487, %v1860
        %v1862 = vpop.f32.mrf.mxu0
        %1863 = vmatprep.mubr.f32.mxu0 0.0
        %1864 = vmatmul.mubr.f32.gmra.mxu0 %v1464
        %v1865 = vpop.f32.mrf.mxu0
        %v1866 = vadd.f32 %v1487, %v1865
        %v1867 = vpop.f32.mrf.mxu0
        %1868 = vmatprep.mubr.f32.mxu0 0.0
        %1869 = vmatmul.mubr.f32.gmra.mxu0 %v1465
        %v1870 = vpop.f32.mrf.mxu0
        %v1871 = vadd.f32 %v1487, %v1870
        %v1872 = vpop.f32.mrf.mxu0
        %1873 = vdwg.mxu0
        %v1874 = vlaneseq
        %v1875 = vand.u32 %v1874, 127
        %vm1876 = vcmp.lt.s32.totalorder %v1875, 4
        %v1877 = vsel %vm1876, %v1556, -1e+30
        %v1878 = vsel %vm1876, %v1561, -1e+30
        %v1879 = vsel %vm1876, %v1566, -1e+30
        %v1880 = vsel %vm1876, %v1571, -1e+30
        %v1881 = vsel %vm1876, %v1576, -1e+30
        %v1882 = vsel %vm1876, %v1581, -1e+30
        %v1883 = vsel %vm1876, %v1586, -1e+30
        %v1884 = vsel %vm1876, %v1591, -1e+30
        %v1885 = vsel %vm1876, %v1596, -1e+30
        %v1886 = vsel %vm1876, %v1601, -1e+30
        %v1887 = vsel %vm1876, %v1606, -1e+30
        %v1888 = vsel %vm1876, %v1611, -1e+30
        %v1889 = vsel %vm1876, %v1616, -1e+30
        %v1890 = vsel %vm1876, %v1621, -1e+30
        %v1891 = vsel %vm1876, %v1626, -1e+30
        %v1892 = vsel %vm1876, %v1631, -1e+30
        %v1893 = vsel %vm1876, %v1636, -1e+30
        %v1894 = vsel %vm1876, %v1641, -1e+30
        %v1895 = vsel %vm1876, %v1646, -1e+30
        %v1896 = vsel %vm1876, %v1651, -1e+30
        %v1897 = vsel %vm1876, %v1656, -1e+30
        %v1898 = vsel %vm1876, %v1661, -1e+30
        %v1899 = vsel %vm1876, %v1666, -1e+30
        %v1900 = vsel %vm1876, %v1671, -1e+30
        %v1901 = vsel %vm1876, %v1676, -1e+30
        %v1902 = vsel %vm1876, %v1681, -1e+30
        %v1903 = vsel %vm1876, %v1686, -1e+30
        %v1904 = vsel %vm1876, %v1691, -1e+30
        %v1905 = vsel %vm1876, %v1696, -1e+30
        %v1906 = vsel %vm1876, %v1701, -1e+30
        %v1907 = vsel %vm1876, %v1706, -1e+30
        %v1908 = vsel %vm1876, %v1711, -1e+30
        %v1909 = vsel %vm1876, %v1716, -1e+30
        %v1910 = vsel %vm1876, %v1721, -1e+30
        %v1911 = vsel %vm1876, %v1726, -1e+30
        %v1912 = vsel %vm1876, %v1731, -1e+30
        %v1913 = vsel %vm1876, %v1736, -1e+30
        %v1914 = vsel %vm1876, %v1741, -1e+30
        %v1915 = vsel %vm1876, %v1746, -1e+30
        %v1916 = vsel %vm1876, %v1751, -1e+30
        %v1917 = vsel %vm1876, %v1756, -1e+30
        %v1918 = vsel %vm1876, %v1761, -1e+30
        %v1919 = vsel %vm1876, %v1766, -1e+30
        %v1920 = vsel %vm1876, %v1771, -1e+30
        %v1921 = vsel %vm1876, %v1776, -1e+30
        %v1922 = vsel %vm1876, %v1781, -1e+30
        %v1923 = vsel %vm1876, %v1786, -1e+30
        %v1924 = vsel %vm1876, %v1791, -1e+30
        %v1925 = vsel %vm1876, %v1796, -1e+30
        %v1926 = vsel %vm1876, %v1801, -1e+30
        %v1927 = vsel %vm1876, %v1806, -1e+30
        %v1928 = vsel %vm1876, %v1811, -1e+30
        %v1929 = vsel %vm1876, %v1816, -1e+30
        %v1930 = vsel %vm1876, %v1821, -1e+30
        %v1931 = vsel %vm1876, %v1826, -1e+30
        %v1932 = vsel %vm1876, %v1831, -1e+30
        %v1933 = vsel %vm1876, %v1836, -1e+30
        %v1934 = vsel %vm1876, %v1841, -1e+30
        %v1935 = vsel %vm1876, %v1846, -1e+30
        %v1936 = vsel %vm1876, %v1851, -1e+30
        %v1937 = vsel %vm1876, %v1856, -1e+30
        %v1938 = vsel %vm1876, %v1861, -1e+30
        %v1939 = vsel %vm1876, %v1866, -1e+30
        %v1940 = vsel %vm1876, %v1871, -1e+30
        %1941 = vmax.xlane.f32.xlu0 %v1877
        %v1942 = vpop.xlane.xlu0 %1941
        %1943 = vmax.xlane.f32.xlu0 %v1878
        %v1944 = vpop.xlane.xlu0 %1943
        %1945 = vmax.xlane.f32.xlu0 %v1879
        %v1946 = vpop.xlane.xlu0 %1945
        %1947 = vmax.xlane.f32.xlu0 %v1880
        %v1948 = vpop.xlane.xlu0 %1947
        %1949 = vmax.xlane.f32.xlu0 %v1881
        %v1950 = vpop.xlane.xlu0 %1949
        %1951 = vmax.xlane.f32.xlu0 %v1882
        %v1952 = vpop.xlane.xlu0 %1951
        %1953 = vmax.xlane.f32.xlu0 %v1883
        %v1954 = vpop.xlane.xlu0 %1953
        %1955 = vmax.xlane.f32.xlu0 %v1884
        %v1956 = vpop.xlane.xlu0 %1955
        %1957 = vmax.xlane.f32.xlu0 %v1885
        %v1958 = vpop.xlane.xlu0 %1957
        %1959 = vmax.xlane.f32.xlu0 %v1886
        %v1960 = vpop.xlane.xlu0 %1959
        %1961 = vmax.xlane.f32.xlu0 %v1887
        %v1962 = vpop.xlane.xlu0 %1961
        %1963 = vmax.xlane.f32.xlu0 %v1888
        %v1964 = vpop.xlane.xlu0 %1963
        %1965 = vmax.xlane.f32.xlu0 %v1889
        %v1966 = vpop.xlane.xlu0 %1965
        %1967 = vmax.xlane.f32.xlu0 %v1890
        %v1968 = vpop.xlane.xlu0 %1967
        %1969 = vmax.xlane.f32.xlu0 %v1891
        %v1970 = vpop.xlane.xlu0 %1969
        %1971 = vmax.xlane.f32.xlu0 %v1892
        %v1972 = vpop.xlane.xlu0 %1971
        %1973 = vmax.xlane.f32.xlu0 %v1893
        %v1974 = vpop.xlane.xlu0 %1973
        %1975 = vmax.xlane.f32.xlu0 %v1894
        %v1976 = vpop.xlane.xlu0 %1975
        %1977 = vmax.xlane.f32.xlu0 %v1895
        %v1978 = vpop.xlane.xlu0 %1977
        %1979 = vmax.xlane.f32.xlu0 %v1896
        %v1980 = vpop.xlane.xlu0 %1979
        %1981 = vmax.xlane.f32.xlu0 %v1897
        %v1982 = vpop.xlane.xlu0 %1981
        %1983 = vmax.xlane.f32.xlu0 %v1898
        %v1984 = vpop.xlane.xlu0 %1983
        %1985 = vmax.xlane.f32.xlu0 %v1899
        %v1986 = vpop.xlane.xlu0 %1985
        %1987 = vmax.xlane.f32.xlu0 %v1900
        %v1988 = vpop.xlane.xlu0 %1987
        %1989 = vmax.xlane.f32.xlu0 %v1901
        %v1990 = vpop.xlane.xlu0 %1989
        %1991 = vmax.xlane.f32.xlu0 %v1902
        %v1992 = vpop.xlane.xlu0 %1991
        %1993 = vmax.xlane.f32.xlu0 %v1903
        %v1994 = vpop.xlane.xlu0 %1993
        %1995 = vmax.xlane.f32.xlu0 %v1904
        %v1996 = vpop.xlane.xlu0 %1995
        %1997 = vmax.xlane.f32.xlu0 %v1905
        %v1998 = vpop.xlane.xlu0 %1997
        %1999 = vmax.xlane.f32.xlu0 %v1906
        %v2000 = vpop.xlane.xlu0 %1999
        %2001 = vmax.xlane.f32.xlu0 %v1907
        %v2002 = vpop.xlane.xlu0 %2001
        %2003 = vmax.xlane.f32.xlu0 %v1908
        %v2004 = vpop.xlane.xlu0 %2003
        %2005 = vmax.xlane.f32.xlu0 %v1909
        %v2006 = vpop.xlane.xlu0 %2005
        %2007 = vmax.xlane.f32.xlu0 %v1910
        %v2008 = vpop.xlane.xlu0 %2007
        %2009 = vmax.xlane.f32.xlu0 %v1911
        %v2010 = vpop.xlane.xlu0 %2009
        %2011 = vmax.xlane.f32.xlu0 %v1912
        %v2012 = vpop.xlane.xlu0 %2011
        %2013 = vmax.xlane.f32.xlu0 %v1913
        %v2014 = vpop.xlane.xlu0 %2013
        %2015 = vmax.xlane.f32.xlu0 %v1914
        %v2016 = vpop.xlane.xlu0 %2015
        %2017 = vmax.xlane.f32.xlu0 %v1915
        %v2018 = vpop.xlane.xlu0 %2017
        %2019 = vmax.xlane.f32.xlu0 %v1916
        %v2020 = vpop.xlane.xlu0 %2019
        %2021 = vmax.xlane.f32.xlu0 %v1917
        %v2022 = vpop.xlane.xlu0 %2021
        %2023 = vmax.xlane.f32.xlu0 %v1918
        %v2024 = vpop.xlane.xlu0 %2023
        %2025 = vmax.xlane.f32.xlu0 %v1919
        %v2026 = vpop.xlane.xlu0 %2025
        %2027 = vmax.xlane.f32.xlu0 %v1920
        %v2028 = vpop.xlane.xlu0 %2027
        %2029 = vmax.xlane.f32.xlu0 %v1921
        %v2030 = vpop.xlane.xlu0 %2029
        %2031 = vmax.xlane.f32.xlu0 %v1922
        %v2032 = vpop.xlane.xlu0 %2031
        %2033 = vmax.xlane.f32.xlu0 %v1923
        %v2034 = vpop.xlane.xlu0 %2033
        %2035 = vmax.xlane.f32.xlu0 %v1924
        %v2036 = vpop.xlane.xlu0 %2035
        %2037 = vmax.xlane.f32.xlu0 %v1925
        %v2038 = vpop.xlane.xlu0 %2037
        %2039 = vmax.xlane.f32.xlu0 %v1926
        %v2040 = vpop.xlane.xlu0 %2039
        %2041 = vmax.xlane.f32.xlu0 %v1927
        %v2042 = vpop.xlane.xlu0 %2041
        %2043 = vmax.xlane.f32.xlu0 %v1928
        %v2044 = vpop.xlane.xlu0 %2043
        %2045 = vmax.xlane.f32.xlu0 %v1929
        %v2046 = vpop.xlane.xlu0 %2045
        %2047 = vmax.xlane.f32.xlu0 %v1930
        %v2048 = vpop.xlane.xlu0 %2047
        %2049 = vmax.xlane.f32.xlu0 %v1931
        %v2050 = vpop.xlane.xlu0 %2049
        %2051 = vmax.xlane.f32.xlu0 %v1932
        %v2052 = vpop.xlane.xlu0 %2051
        %2053 = vmax.xlane.f32.xlu0 %v1933
        %v2054 = vpop.xlane.xlu0 %2053
        %2055 = vmax.xlane.f32.xlu0 %v1934
        %v2056 = vpop.xlane.xlu0 %2055
        %2057 = vmax.xlane.f32.xlu0 %v1935
        %v2058 = vpop.xlane.xlu0 %2057
        %2059 = vmax.xlane.f32.xlu0 %v1936
        %v2060 = vpop.xlane.xlu0 %2059
        %2061 = vmax.xlane.f32.xlu0 %v1937
        %v2062 = vpop.xlane.xlu0 %2061
        %2063 = vmax.xlane.f32.xlu0 %v1938
        %v2064 = vpop.xlane.xlu0 %2063
        %2065 = vmax.xlane.f32.xlu0 %v1939
        %v2066 = vpop.xlane.xlu0 %2065
        %2067 = vmax.xlane.f32.xlu0 %v1940
        %v2068 = vpop.xlane.xlu0 %2067
        %v2069 = vsub.f32 %v1877, %v1942
        %v2070 = vsub.f32 %v1878, %v1944
        %v2071 = vsub.f32 %v1879, %v1946
        %v2072 = vsub.f32 %v1880, %v1948
        %v2073 = vsub.f32 %v1881, %v1950
        %v2074 = vsub.f32 %v1882, %v1952
        %v2075 = vsub.f32 %v1883, %v1954
        %v2076 = vsub.f32 %v1884, %v1956
        %v2077 = vsub.f32 %v1885, %v1958
        %v2078 = vsub.f32 %v1886, %v1960
        %v2079 = vsub.f32 %v1887, %v1962
        %v2080 = vsub.f32 %v1888, %v1964
        %v2081 = vsub.f32 %v1889, %v1966
        %v2082 = vsub.f32 %v1890, %v1968
        %v2083 = vsub.f32 %v1891, %v1970
        %v2084 = vsub.f32 %v1892, %v1972
        %v2085 = vsub.f32 %v1893, %v1974
        %v2086 = vsub.f32 %v1894, %v1976
        %v2087 = vsub.f32 %v1895, %v1978
        %v2088 = vsub.f32 %v1896, %v1980
        %v2089 = vsub.f32 %v1897, %v1982
        %v2090 = vsub.f32 %v1898, %v1984
        %v2091 = vsub.f32 %v1899, %v1986
        %v2092 = vsub.f32 %v1900, %v1988
        %v2093 = vsub.f32 %v1901, %v1990
        %v2094 = vsub.f32 %v1902, %v1992
        %v2095 = vsub.f32 %v1903, %v1994
        %v2096 = vsub.f32 %v1904, %v1996
        %v2097 = vsub.f32 %v1905, %v1998
        %v2098 = vsub.f32 %v1906, %v2000
        %v2099 = vsub.f32 %v1907, %v2002
        %v2100 = vsub.f32 %v1908, %v2004
        %v2101 = vsub.f32 %v1909, %v2006
        %v2102 = vsub.f32 %v1910, %v2008
        %v2103 = vsub.f32 %v1911, %v2010
        %v2104 = vsub.f32 %v1912, %v2012
        %v2105 = vsub.f32 %v1913, %v2014
        %v2106 = vsub.f32 %v1914, %v2016
        %v2107 = vsub.f32 %v1915, %v2018
        %v2108 = vsub.f32 %v1916, %v2020
        %v2109 = vsub.f32 %v1917, %v2022
        %v2110 = vsub.f32 %v1918, %v2024
        %v2111 = vsub.f32 %v1919, %v2026
        %v2112 = vsub.f32 %v1920, %v2028
        %v2113 = vsub.f32 %v1921, %v2030
        %v2114 = vsub.f32 %v1922, %v2032
        %v2115 = vsub.f32 %v1923, %v2034
        %v2116 = vsub.f32 %v1924, %v2036
        %v2117 = vsub.f32 %v1925, %v2038
        %v2118 = vsub.f32 %v1926, %v2040
        %v2119 = vsub.f32 %v1927, %v2042
        %v2120 = vsub.f32 %v1928, %v2044
        %v2121 = vsub.f32 %v1929, %v2046
        %v2122 = vsub.f32 %v1930, %v2048
        %v2123 = vsub.f32 %v1931, %v2050
        %v2124 = vsub.f32 %v1932, %v2052
        %v2125 = vsub.f32 %v1933, %v2054
        %v2126 = vsub.f32 %v1934, %v2056
        %v2127 = vsub.f32 %v1935, %v2058
        %v2128 = vsub.f32 %v1936, %v2060
        %v2129 = vsub.f32 %v1937, %v2062
        %v2130 = vsub.f32 %v1938, %v2064
        %v2131 = vsub.f32 %v1939, %v2066
        %v2132 = vsub.f32 %v1940, %v2068
        %v2133 = vmul.f32 %v2069, 1.442695
        %v2134 = vpow.pop %v2133
        %v2135 = vmul.f32 %v2070, 1.442695
        %v2136 = vpow.pop %v2135
        %v2137 = vmul.f32 %v2071, 1.442695
        %v2138 = vpow.pop %v2137
        %v2139 = vmul.f32 %v2072, 1.442695
        %v2140 = vpow.pop %v2139
        %v2141 = vmul.f32 %v2073, 1.442695
        %v2142 = vpow.pop %v2141
        %v2143 = vmul.f32 %v2074, 1.442695
        %v2144 = vpow.pop %v2143
        %v2145 = vmul.f32 %v2075, 1.442695
        %v2146 = vpow.pop %v2145
        %v2147 = vmul.f32 %v2076, 1.442695
        %v2148 = vpow.pop %v2147
        %v2149 = vmul.f32 %v2077, 1.442695
        %v2150 = vpow.pop %v2149
        %v2151 = vmul.f32 %v2078, 1.442695
        %v2152 = vpow.pop %v2151
        %v2153 = vmul.f32 %v2079, 1.442695
        %v2154 = vpow.pop %v2153
        %v2155 = vmul.f32 %v2080, 1.442695
        %v2156 = vpow.pop %v2155
        %v2157 = vmul.f32 %v2081, 1.442695
        %v2158 = vpow.pop %v2157
        %v2159 = vmul.f32 %v2082, 1.442695
        %v2160 = vpow.pop %v2159
        %v2161 = vmul.f32 %v2083, 1.442695
        %v2162 = vpow.pop %v2161
        %v2163 = vmul.f32 %v2084, 1.442695
        %v2164 = vpow.pop %v2163
        %v2165 = vmul.f32 %v2085, 1.442695
        %v2166 = vpow.pop %v2165
        %v2167 = vmul.f32 %v2086, 1.442695
        %v2168 = vpow.pop %v2167
        %v2169 = vmul.f32 %v2087, 1.442695
        %v2170 = vpow.pop %v2169
        %v2171 = vmul.f32 %v2088, 1.442695
        %v2172 = vpow.pop %v2171
        %v2173 = vmul.f32 %v2089, 1.442695
        %v2174 = vpow.pop %v2173
        %v2175 = vmul.f32 %v2090, 1.442695
        %v2176 = vpow.pop %v2175
        %v2177 = vmul.f32 %v2091, 1.442695
        %v2178 = vpow.pop %v2177
        %v2179 = vmul.f32 %v2092, 1.442695
        %v2180 = vpow.pop %v2179
        %v2181 = vmul.f32 %v2093, 1.442695
        %v2182 = vpow.pop %v2181
        %v2183 = vmul.f32 %v2094, 1.442695
        %v2184 = vpow.pop %v2183
        %v2185 = vmul.f32 %v2095, 1.442695
        %v2186 = vpow.pop %v2185
        %v2187 = vmul.f32 %v2096, 1.442695
        %v2188 = vpow.pop %v2187
        %v2189 = vmul.f32 %v2097, 1.442695
        %v2190 = vpow.pop %v2189
        %v2191 = vmul.f32 %v2098, 1.442695
        %v2192 = vpow.pop %v2191
        %v2193 = vmul.f32 %v2099, 1.442695
        %v2194 = vpow.pop %v2193
        %v2195 = vmul.f32 %v2100, 1.442695
        %v2196 = vpow.pop %v2195
        %v2197 = vmul.f32 %v2101, 1.442695
        %v2198 = vpow.pop %v2197
        %v2199 = vmul.f32 %v2102, 1.442695
        %v2200 = vpow.pop %v2199
        %v2201 = vmul.f32 %v2103, 1.442695
        %v2202 = vpow.pop %v2201
        %v2203 = vmul.f32 %v2104, 1.442695
        %v2204 = vpow.pop %v2203
        %v2205 = vmul.f32 %v2105, 1.442695
        %v2206 = vpow.pop %v2205
        %v2207 = vmul.f32 %v2106, 1.442695
        %v2208 = vpow.pop %v2207
        %v2209 = vmul.f32 %v2107, 1.442695
        %v2210 = vpow.pop %v2209
        %v2211 = vmul.f32 %v2108, 1.442695
        %v2212 = vpow.pop %v2211
        %v2213 = vmul.f32 %v2109, 1.442695
        %v2214 = vpow.pop %v2213
        %v2215 = vmul.f32 %v2110, 1.442695
        %v2216 = vpow.pop %v2215
        %v2217 = vmul.f32 %v2111, 1.442695
        %v2218 = vpow.pop %v2217
        %v2219 = vmul.f32 %v2112, 1.442695
        %v2220 = vpow.pop %v2219
        %v2221 = vmul.f32 %v2113, 1.442695
        %v2222 = vpow.pop %v2221
        %v2223 = vmul.f32 %v2114, 1.442695
        %v2224 = vpow.pop %v2223
        %v2225 = vmul.f32 %v2115, 1.442695
        %v2226 = vpow.pop %v2225
        %v2227 = vmul.f32 %v2116, 1.442695
        %v2228 = vpow.pop %v2227
        %v2229 = vmul.f32 %v2117, 1.442695
        %v2230 = vpow.pop %v2229
        %v2231 = vmul.f32 %v2118, 1.442695
        %v2232 = vpow.pop %v2231
        %v2233 = vmul.f32 %v2119, 1.442695
        %v2234 = vpow.pop %v2233
        %v2235 = vmul.f32 %v2120, 1.442695
        %v2236 = vpow.pop %v2235
        %v2237 = vmul.f32 %v2121, 1.442695
        %v2238 = vpow.pop %v2237
        %v2239 = vmul.f32 %v2122, 1.442695
        %v2240 = vpow.pop %v2239
        %v2241 = vmul.f32 %v2123, 1.442695
        %v2242 = vpow.pop %v2241
        %v2243 = vmul.f32 %v2124, 1.442695
        %v2244 = vpow.pop %v2243
        %v2245 = vmul.f32 %v2125, 1.442695
        %v2246 = vpow.pop %v2245
        %v2247 = vmul.f32 %v2126, 1.442695
        %v2248 = vpow.pop %v2247
        %v2249 = vmul.f32 %v2127, 1.442695
        %v2250 = vpow.pop %v2249
        %v2251 = vmul.f32 %v2128, 1.442695
        %v2252 = vpow.pop %v2251
        %v2253 = vmul.f32 %v2129, 1.442695
        %v2254 = vpow.pop %v2253
        %v2255 = vmul.f32 %v2130, 1.442695
        %v2256 = vpow.pop %v2255
        %v2257 = vmul.f32 %v2131, 1.442695
        %v2258 = vpow.pop %v2257
        %v2259 = vmul.f32 %v2132, 1.442695
        %v2260 = vpow.pop %v2259
        %2261 = vadd.xlane.f32.xlu0 %v2134
        %v2262 = vpop.xlane.xlu0 %2261
        %2263 = vadd.xlane.f32.xlu0 %v2136
        %v2264 = vpop.xlane.xlu0 %2263
        %2265 = vadd.xlane.f32.xlu0 %v2138
        %v2266 = vpop.xlane.xlu0 %2265
        %2267 = vadd.xlane.f32.xlu0 %v2140
        %v2268 = vpop.xlane.xlu0 %2267
        %2269 = vadd.xlane.f32.xlu0 %v2142
        %v2270 = vpop.xlane.xlu0 %2269
        %2271 = vadd.xlane.f32.xlu0 %v2144
        %v2272 = vpop.xlane.xlu0 %2271
        %2273 = vadd.xlane.f32.xlu0 %v2146
        %v2274 = vpop.xlane.xlu0 %2273
        %2275 = vadd.xlane.f32.xlu0 %v2148
        %v2276 = vpop.xlane.xlu0 %2275
        %2277 = vadd.xlane.f32.xlu0 %v2150
        %v2278 = vpop.xlane.xlu0 %2277
        %2279 = vadd.xlane.f32.xlu0 %v2152
        %v2280 = vpop.xlane.xlu0 %2279
        %2281 = vadd.xlane.f32.xlu0 %v2154
        %v2282 = vpop.xlane.xlu0 %2281
        %2283 = vadd.xlane.f32.xlu0 %v2156
        %v2284 = vpop.xlane.xlu0 %2283
        %2285 = vadd.xlane.f32.xlu0 %v2158
        %v2286 = vpop.xlane.xlu0 %2285
        %2287 = vadd.xlane.f32.xlu0 %v2160
        %v2288 = vpop.xlane.xlu0 %2287
        %2289 = vadd.xlane.f32.xlu0 %v2162
        %v2290 = vpop.xlane.xlu0 %2289
        %2291 = vadd.xlane.f32.xlu0 %v2164
        %v2292 = vpop.xlane.xlu0 %2291
        %2293 = vadd.xlane.f32.xlu0 %v2166
        %v2294 = vpop.xlane.xlu0 %2293
        %2295 = vadd.xlane.f32.xlu0 %v2168
        %v2296 = vpop.xlane.xlu0 %2295
        %2297 = vadd.xlane.f32.xlu0 %v2170
        %v2298 = vpop.xlane.xlu0 %2297
        %2299 = vadd.xlane.f32.xlu0 %v2172
        %v2300 = vpop.xlane.xlu0 %2299
        %2301 = vadd.xlane.f32.xlu0 %v2174
        %v2302 = vpop.xlane.xlu0 %2301
        %2303 = vadd.xlane.f32.xlu0 %v2176
        %v2304 = vpop.xlane.xlu0 %2303
        %2305 = vadd.xlane.f32.xlu0 %v2178
        %v2306 = vpop.xlane.xlu0 %2305
        %2307 = vadd.xlane.f32.xlu0 %v2180
        %v2308 = vpop.xlane.xlu0 %2307
        %2309 = vadd.xlane.f32.xlu0 %v2182
        %v2310 = vpop.xlane.xlu0 %2309
        %2311 = vadd.xlane.f32.xlu0 %v2184
        %v2312 = vpop.xlane.xlu0 %2311
        %2313 = vadd.xlane.f32.xlu0 %v2186
        %v2314 = vpop.xlane.xlu0 %2313
        %2315 = vadd.xlane.f32.xlu0 %v2188
        %v2316 = vpop.xlane.xlu0 %2315
        %2317 = vadd.xlane.f32.xlu0 %v2190
        %v2318 = vpop.xlane.xlu0 %2317
        %2319 = vadd.xlane.f32.xlu0 %v2192
        %v2320 = vpop.xlane.xlu0 %2319
        %2321 = vadd.xlane.f32.xlu0 %v2194
        %v2322 = vpop.xlane.xlu0 %2321
        %2323 = vadd.xlane.f32.xlu0 %v2196
        %v2324 = vpop.xlane.xlu0 %2323
        %2325 = vadd.xlane.f32.xlu0 %v2198
        %v2326 = vpop.xlane.xlu0 %2325
        %2327 = vadd.xlane.f32.xlu0 %v2200
        %v2328 = vpop.xlane.xlu0 %2327
        %2329 = vadd.xlane.f32.xlu0 %v2202
        %v2330 = vpop.xlane.xlu0 %2329
        %2331 = vadd.xlane.f32.xlu0 %v2204
        %v2332 = vpop.xlane.xlu0 %2331
        %2333 = vadd.xlane.f32.xlu0 %v2206
        %v2334 = vpop.xlane.xlu0 %2333
        %2335 = vadd.xlane.f32.xlu0 %v2208
        %v2336 = vpop.xlane.xlu0 %2335
        %2337 = vadd.xlane.f32.xlu0 %v2210
        %v2338 = vpop.xlane.xlu0 %2337
        %2339 = vadd.xlane.f32.xlu0 %v2212
        %v2340 = vpop.xlane.xlu0 %2339
        %2341 = vadd.xlane.f32.xlu0 %v2214
        %v2342 = vpop.xlane.xlu0 %2341
        %2343 = vadd.xlane.f32.xlu0 %v2216
        %v2344 = vpop.xlane.xlu0 %2343
        %2345 = vadd.xlane.f32.xlu0 %v2218
        %v2346 = vpop.xlane.xlu0 %2345
        %2347 = vadd.xlane.f32.xlu0 %v2220
        %v2348 = vpop.xlane.xlu0 %2347
        %2349 = vadd.xlane.f32.xlu0 %v2222
        %v2350 = vpop.xlane.xlu0 %2349
        %2351 = vadd.xlane.f32.xlu0 %v2224
        %v2352 = vpop.xlane.xlu0 %2351
        %2353 = vadd.xlane.f32.xlu0 %v2226
        %v2354 = vpop.xlane.xlu0 %2353
        %2355 = vadd.xlane.f32.xlu0 %v2228
        %v2356 = vpop.xlane.xlu0 %2355
        %2357 = vadd.xlane.f32.xlu0 %v2230
        %v2358 = vpop.xlane.xlu0 %2357
        %2359 = vadd.xlane.f32.xlu0 %v2232
        %v2360 = vpop.xlane.xlu0 %2359
        %2361 = vadd.xlane.f32.xlu0 %v2234
        %v2362 = vpop.xlane.xlu0 %2361
        %2363 = vadd.xlane.f32.xlu0 %v2236
        %v2364 = vpop.xlane.xlu0 %2363
        %2365 = vadd.xlane.f32.xlu0 %v2238
        %v2366 = vpop.xlane.xlu0 %2365
        %2367 = vadd.xlane.f32.xlu0 %v2240
        %v2368 = vpop.xlane.xlu0 %2367
        %2369 = vadd.xlane.f32.xlu0 %v2242
        %v2370 = vpop.xlane.xlu0 %2369
        %2371 = vadd.xlane.f32.xlu0 %v2244
        %v2372 = vpop.xlane.xlu0 %2371
        %2373 = vadd.xlane.f32.xlu0 %v2246
        %v2374 = vpop.xlane.xlu0 %2373
        %2375 = vadd.xlane.f32.xlu0 %v2248
        %v2376 = vpop.xlane.xlu0 %2375
        %2377 = vadd.xlane.f32.xlu0 %v2250
        %v2378 = vpop.xlane.xlu0 %2377
        %2379 = vadd.xlane.f32.xlu0 %v2252
        %v2380 = vpop.xlane.xlu0 %2379
        %2381 = vadd.xlane.f32.xlu0 %v2254
        %v2382 = vpop.xlane.xlu0 %2381
        %2383 = vadd.xlane.f32.xlu0 %v2256
        %v2384 = vpop.xlane.xlu0 %2383
        %2385 = vadd.xlane.f32.xlu0 %v2258
        %v2386 = vpop.xlane.xlu0 %2385
        %2387 = vadd.xlane.f32.xlu0 %v2260
        %v2388 = vpop.xlane.xlu0 %2387
        %v2389 = vrcp.pop %v2262
        %v2390 = vmul.f32 %v2134, %v2389
        %v2391 = vrcp.pop %v2264
        %v2392 = vmul.f32 %v2136, %v2391
        %v2393 = vrcp.pop %v2266
        %v2394 = vmul.f32 %v2138, %v2393
        %v2395 = vrcp.pop %v2268
        %v2396 = vmul.f32 %v2140, %v2395
        %v2397 = vrcp.pop %v2270
        %v2398 = vmul.f32 %v2142, %v2397
        %v2399 = vrcp.pop %v2272
        %v2400 = vmul.f32 %v2144, %v2399
        %v2401 = vrcp.pop %v2274
        %v2402 = vmul.f32 %v2146, %v2401
        %v2403 = vrcp.pop %v2276
        %v2404 = vmul.f32 %v2148, %v2403
        %v2405 = vrcp.pop %v2278
        %v2406 = vmul.f32 %v2150, %v2405
        %v2407 = vrcp.pop %v2280
        %v2408 = vmul.f32 %v2152, %v2407
        %v2409 = vrcp.pop %v2282
        %v2410 = vmul.f32 %v2154, %v2409
        %v2411 = vrcp.pop %v2284
        %v2412 = vmul.f32 %v2156, %v2411
        %v2413 = vrcp.pop %v2286
        %v2414 = vmul.f32 %v2158, %v2413
        %v2415 = vrcp.pop %v2288
        %v2416 = vmul.f32 %v2160, %v2415
        %v2417 = vrcp.pop %v2290
        %v2418 = vmul.f32 %v2162, %v2417
        %v2419 = vrcp.pop %v2292
        %v2420 = vmul.f32 %v2164, %v2419
        %v2421 = vrcp.pop %v2294
        %v2422 = vmul.f32 %v2166, %v2421
        %v2423 = vrcp.pop %v2296
        %v2424 = vmul.f32 %v2168, %v2423
        %v2425 = vrcp.pop %v2298
        %v2426 = vmul.f32 %v2170, %v2425
        %v2427 = vrcp.pop %v2300
        %v2428 = vmul.f32 %v2172, %v2427
        %v2429 = vrcp.pop %v2302
        %v2430 = vmul.f32 %v2174, %v2429
        %v2431 = vrcp.pop %v2304
        %v2432 = vmul.f32 %v2176, %v2431
        %v2433 = vrcp.pop %v2306
        %v2434 = vmul.f32 %v2178, %v2433
        %v2435 = vrcp.pop %v2308
        %v2436 = vmul.f32 %v2180, %v2435
        %v2437 = vrcp.pop %v2310
        %v2438 = vmul.f32 %v2182, %v2437
        %v2439 = vrcp.pop %v2312
        %v2440 = vmul.f32 %v2184, %v2439
        %v2441 = vrcp.pop %v2314
        %v2442 = vmul.f32 %v2186, %v2441
        %v2443 = vrcp.pop %v2316
        %v2444 = vmul.f32 %v2188, %v2443
        %v2445 = vrcp.pop %v2318
        %v2446 = vmul.f32 %v2190, %v2445
        %v2447 = vrcp.pop %v2320
        %v2448 = vmul.f32 %v2192, %v2447
        %v2449 = vrcp.pop %v2322
        %v2450 = vmul.f32 %v2194, %v2449
        %v2451 = vrcp.pop %v2324
        %v2452 = vmul.f32 %v2196, %v2451
        %v2453 = vrcp.pop %v2326
        %v2454 = vmul.f32 %v2198, %v2453
        %v2455 = vrcp.pop %v2328
        %v2456 = vmul.f32 %v2200, %v2455
        %v2457 = vrcp.pop %v2330
        %v2458 = vmul.f32 %v2202, %v2457
        %v2459 = vrcp.pop %v2332
        %v2460 = vmul.f32 %v2204, %v2459
        %v2461 = vrcp.pop %v2334
        %v2462 = vmul.f32 %v2206, %v2461
        %v2463 = vrcp.pop %v2336
        %v2464 = vmul.f32 %v2208, %v2463
        %v2465 = vrcp.pop %v2338
        %v2466 = vmul.f32 %v2210, %v2465
        %v2467 = vrcp.pop %v2340
        %v2468 = vmul.f32 %v2212, %v2467
        %v2469 = vrcp.pop %v2342
        %v2470 = vmul.f32 %v2214, %v2469
        %v2471 = vrcp.pop %v2344
        %v2472 = vmul.f32 %v2216, %v2471
        %v2473 = vrcp.pop %v2346
        %v2474 = vmul.f32 %v2218, %v2473
        %v2475 = vrcp.pop %v2348
        %v2476 = vmul.f32 %v2220, %v2475
        %v2477 = vrcp.pop %v2350
        %v2478 = vmul.f32 %v2222, %v2477
        %v2479 = vrcp.pop %v2352
        %v2480 = vmul.f32 %v2224, %v2479
        %v2481 = vrcp.pop %v2354
        %v2482 = vmul.f32 %v2226, %v2481
        %v2483 = vrcp.pop %v2356
        %v2484 = vmul.f32 %v2228, %v2483
        %v2485 = vrcp.pop %v2358
        %v2486 = vmul.f32 %v2230, %v2485
        %v2487 = vrcp.pop %v2360
        %v2488 = vmul.f32 %v2232, %v2487
        %v2489 = vrcp.pop %v2362
        %v2490 = vmul.f32 %v2234, %v2489
        %v2491 = vrcp.pop %v2364
        %v2492 = vmul.f32 %v2236, %v2491
        %v2493 = vrcp.pop %v2366
        %v2494 = vmul.f32 %v2238, %v2493
        %v2495 = vrcp.pop %v2368
        %v2496 = vmul.f32 %v2240, %v2495
        %v2497 = vrcp.pop %v2370
        %v2498 = vmul.f32 %v2242, %v2497
        %v2499 = vrcp.pop %v2372
        %v2500 = vmul.f32 %v2244, %v2499
        %v2501 = vrcp.pop %v2374
        %v2502 = vmul.f32 %v2246, %v2501
        %v2503 = vrcp.pop %v2376
        %v2504 = vmul.f32 %v2248, %v2503
        %v2505 = vrcp.pop %v2378
        %v2506 = vmul.f32 %v2250, %v2505
        %v2507 = vrcp.pop %v2380
        %v2508 = vmul.f32 %v2252, %v2507
        %v2509 = vrcp.pop %v2382
        %v2510 = vmul.f32 %v2254, %v2509
        %v2511 = vrcp.pop %v2384
        %v2512 = vmul.f32 %v2256, %v2511
        %v2513 = vrcp.pop %v2386
        %v2514 = vmul.f32 %v2258, %v2513
        %v2515 = vrcp.pop %v2388
        %v2516 = vmul.f32 %v2260, %v2515
        %vm2517 = vcmp.eq.s32.totalorder %v1875, 4
        %v2518 = vsel %vm2517, %v1556, %v2390
        %v2519 = vsel %vm2517, %v1561, %v2392
        %v2520 = vsel %vm2517, %v1566, %v2394
        %v2521 = vsel %vm2517, %v1571, %v2396
        %v2522 = vsel %vm2517, %v1576, %v2398
        %v2523 = vsel %vm2517, %v1581, %v2400
        %v2524 = vsel %vm2517, %v1586, %v2402
        %v2525 = vsel %vm2517, %v1591, %v2404
        %v2526 = vsel %vm2517, %v1596, %v2406
        %v2527 = vsel %vm2517, %v1601, %v2408
        %v2528 = vsel %vm2517, %v1606, %v2410
        %v2529 = vsel %vm2517, %v1611, %v2412
        %v2530 = vsel %vm2517, %v1616, %v2414
        %v2531 = vsel %vm2517, %v1621, %v2416
        %v2532 = vsel %vm2517, %v1626, %v2418
        %v2533 = vsel %vm2517, %v1631, %v2420
        %v2534 = vsel %vm2517, %v1636, %v2422
        %v2535 = vsel %vm2517, %v1641, %v2424
        %v2536 = vsel %vm2517, %v1646, %v2426
        %v2537 = vsel %vm2517, %v1651, %v2428
        %v2538 = vsel %vm2517, %v1656, %v2430
        %v2539 = vsel %vm2517, %v1661, %v2432
        %v2540 = vsel %vm2517, %v1666, %v2434
        %v2541 = vsel %vm2517, %v1671, %v2436
        %v2542 = vsel %vm2517, %v1676, %v2438
        %v2543 = vsel %vm2517, %v1681, %v2440
        %v2544 = vsel %vm2517, %v1686, %v2442
        %v2545 = vsel %vm2517, %v1691, %v2444
        %v2546 = vsel %vm2517, %v1696, %v2446
        %v2547 = vsel %vm2517, %v1701, %v2448
        %v2548 = vsel %vm2517, %v1706, %v2450
        %v2549 = vsel %vm2517, %v1711, %v2452
        %v2550 = vsel %vm2517, %v1716, %v2454
        %v2551 = vsel %vm2517, %v1721, %v2456
        %v2552 = vsel %vm2517, %v1726, %v2458
        %v2553 = vsel %vm2517, %v1731, %v2460
        %v2554 = vsel %vm2517, %v1736, %v2462
        %v2555 = vsel %vm2517, %v1741, %v2464
        %v2556 = vsel %vm2517, %v1746, %v2466
        %v2557 = vsel %vm2517, %v1751, %v2468
        %v2558 = vsel %vm2517, %v1756, %v2470
        %v2559 = vsel %vm2517, %v1761, %v2472
        %v2560 = vsel %vm2517, %v1766, %v2474
        %v2561 = vsel %vm2517, %v1771, %v2476
        %v2562 = vsel %vm2517, %v1776, %v2478
        %v2563 = vsel %vm2517, %v1781, %v2480
        %v2564 = vsel %vm2517, %v1786, %v2482
        %v2565 = vsel %vm2517, %v1791, %v2484
        %v2566 = vsel %vm2517, %v1796, %v2486
        %v2567 = vsel %vm2517, %v1801, %v2488
        %v2568 = vsel %vm2517, %v1806, %v2490
        %v2569 = vsel %vm2517, %v1811, %v2492
        %v2570 = vsel %vm2517, %v1816, %v2494
        %v2571 = vsel %vm2517, %v1821, %v2496
        %v2572 = vsel %vm2517, %v1826, %v2498
        %v2573 = vsel %vm2517, %v1831, %v2500
        %v2574 = vsel %vm2517, %v1836, %v2502
        %v2575 = vsel %vm2517, %v1841, %v2504
        %v2576 = vsel %vm2517, %v1846, %v2506
        %v2577 = vsel %vm2517, %v1851, %v2508
        %v2578 = vsel %vm2517, %v1856, %v2510
        %v2579 = vsel %vm2517, %v1861, %v2512
        %v2580 = vsel %vm2517, %v1866, %v2514
        %v2581 = vsel %vm2517, %v1871, %v2516
        %2582 = vst [vmem:[%s272] sm:$0xff] %v2518
        %2583 = vst [vmem:[%s272 + $0x8] sm:$0xff] %v2519
        %2584 = vst [vmem:[%s272 + $0x10] sm:$0xff] %v2520
        %2585 = vst [vmem:[%s272 + $0x18] sm:$0xff] %v2521
        %2586 = vst [vmem:[%s272 + $0x20] sm:$0xff] %v2522
        %2587 = vst [vmem:[%s272 + $0x28] sm:$0xff] %v2523
        %2588 = vst [vmem:[%s272 + $0x30] sm:$0xff] %v2524
        %2589 = vst [vmem:[%s272 + $0x38] sm:$0xff] %v2525
        %2590 = vst [vmem:[%s272 + $0x40] sm:$0xff] %v2526
        %2591 = vst [vmem:[%s272 + $0x48] sm:$0xff] %v2527
        %2592 = vst [vmem:[%s272 + $0x50] sm:$0xff] %v2528
        %2593 = vst [vmem:[%s272 + $0x58] sm:$0xff] %v2529
        %2594 = vst [vmem:[%s272 + $0x60] sm:$0xff] %v2530
        %2595 = vst [vmem:[%s272 + $0x68] sm:$0xff] %v2531
        %2596 = vst [vmem:[%s272 + $0x70] sm:$0xff] %v2532
        %2597 = vst [vmem:[%s272 + $0x78] sm:$0xff] %v2533
        %2598 = vst [vmem:[%s272 + $0x80] sm:$0xff] %v2534
        %2599 = vst [vmem:[%s272 + $0x88] sm:$0xff] %v2535
        %2600 = vst [vmem:[%s272 + $0x90] sm:$0xff] %v2536
        %2601 = vst [vmem:[%s272 + $0x98] sm:$0xff] %v2537
        %2602 = vst [vmem:[%s272 + $0xa0] sm:$0xff] %v2538
        %2603 = vst [vmem:[%s272 + $0xa8] sm:$0xff] %v2539
        %2604 = vst [vmem:[%s272 + $0xb0] sm:$0xff] %v2540
        %2605 = vst [vmem:[%s272 + $0xb8] sm:$0xff] %v2541
        %2606 = vst [vmem:[%s272 + $0xc0] sm:$0xff] %v2542
        %2607 = vst [vmem:[%s272 + $0xc8] sm:$0xff] %v2543
        %2608 = vst [vmem:[%s272 + $0xd0] sm:$0xff] %v2544
        %2609 = vst [vmem:[%s272 + $0xd8] sm:$0xff] %v2545
        %2610 = vst [vmem:[%s272 + $0xe0] sm:$0xff] %v2546
        %2611 = vst [vmem:[%s272 + $0xe8] sm:$0xff] %v2547
        %2612 = vst [vmem:[%s272 + $0xf0] sm:$0xff] %v2548
        %2613 = vst [vmem:[%s272 + $0xf8] sm:$0xff] %v2549
        %2614 = vst [vmem:[%s272 + $0x100] sm:$0xff] %v2550
        %2615 = vst [vmem:[%s272 + $0x108] sm:$0xff] %v2551
        %2616 = vst [vmem:[%s272 + $0x110] sm:$0xff] %v2552
        %2617 = vst [vmem:[%s272 + $0x118] sm:$0xff] %v2553
        %2618 = vst [vmem:[%s272 + $0x120] sm:$0xff] %v2554
        %2619 = vst [vmem:[%s272 + $0x128] sm:$0xff] %v2555
        %2620 = vst [vmem:[%s272 + $0x130] sm:$0xff] %v2556
        %2621 = vst [vmem:[%s272 + $0x138] sm:$0xff] %v2557
        %2622 = vst [vmem:[%s272 + $0x140] sm:$0xff] %v2558
        %2623 = vst [vmem:[%s272 + $0x148] sm:$0xff] %v2559
        %2624 = vst [vmem:[%s272 + $0x150] sm:$0xff] %v2560
        %2625 = vst [vmem:[%s272 + $0x158] sm:$0xff] %v2561
        %2626 = vst [vmem:[%s272 + $0x160] sm:$0xff] %v2562
        %2627 = vst [vmem:[%s272 + $0x168] sm:$0xff] %v2563
        %2628 = vst [vmem:[%s272 + $0x170] sm:$0xff] %v2564
        %2629 = vst [vmem:[%s272 + $0x178] sm:$0xff] %v2565
        %2630 = vst [vmem:[%s272 + $0x180] sm:$0xff] %v2566
        %2631 = vst [vmem:[%s272 + $0x188] sm:$0xff] %v2567
        %2632 = vst [vmem:[%s272 + $0x190] sm:$0xff] %v2568
        %2633 = vst [vmem:[%s272 + $0x198] sm:$0xff] %v2569
        %2634 = vst [vmem:[%s272 + $0x1a0] sm:$0xff] %v2570
        %2635 = vst [vmem:[%s272 + $0x1a8] sm:$0xff] %v2571
        %2636 = vst [vmem:[%s272 + $0x1b0] sm:$0xff] %v2572
        %2637 = vst [vmem:[%s272 + $0x1b8] sm:$0xff] %v2573
        %2638 = vst [vmem:[%s272 + $0x1c0] sm:$0xff] %v2574
        %2639 = vst [vmem:[%s272 + $0x1c8] sm:$0xff] %v2575
        %2640 = vst [vmem:[%s272 + $0x1d0] sm:$0xff] %v2576
        %2641 = vst [vmem:[%s272 + $0x1d8] sm:$0xff] %v2577
        %2642 = vst [vmem:[%s272 + $0x1e0] sm:$0xff] %v2578
        %2643 = vst [vmem:[%s272 + $0x1e8] sm:$0xff] %v2579
        %2644 = vst [vmem:[%s272 + $0x1f0] sm:$0xff] %v2580
        %2645 = vst [vmem:[%s272 + $0x1f8] sm:$0xff] %v2581
        %s2646 = sand.u32 %s181, 1
        %s2647 = scalar_lea.sflag [#allocation3], %s2646
        %s2648 = sand.u32 %s181, 1
        %s2649 = smul.addr %s2648, 512
        %s2650 = scalar_lea.vmem [#allocation2], %s2649
        // Predicated region
        $region49: #{tpu_custom_call.1} parent=47 // pred_check
          %p2651 = pneg %p191
        $region50: #{tpu_custom_call.1} parent=47 // pred_check_branch
          %2653 = sbr.rel (%p2651) target = $region52
        $region51: #{tpu_custom_call.1} parent=47 // pred_region
          %s2654 = smul.u32 64, %s21
          %s2656 = ssub.s32 8192, 8192
          %2657 = vsyncadd %s2647, %s2656
          %s2658 = smul.addr %s2654, 128
          %s2659 = scalar_lea.hbm %s7, %s2658
          %s2660 = sshll.u32 %s2650, 4
          %s2661 = int_to_ptr.vmem [resolvable:$true] %s2660
          %2666 = dma.vmem_to_hbm [thread:$0]  %s2661, 8192, %s2659, %s2647, 128, 128, 8
        $region52: #{tpu_custom_call.1} parent=47 // pred_fallthru
          _
      $region48: #{tpu_custom_call.1} parent=5 // pred_fallthru
        _
      %p2667 = scmp.le.s32.totalorder 2, %s16
      // Predicated region
      $region53: #{tpu_custom_call.1} parent=5 // pred_check
        %p2668 = pneg %p2667
      $region54: #{tpu_custom_call.1} parent=5 // pred_check_branch
        %2670 = sbr.rel (%p2668) target = $region56
      $region55: #{tpu_custom_call.1} parent=5 // pred_region
        %s2671 = ssub.s32 %s16, 2
        // Predicated region
        $region57: #{tpu_custom_call.1} parent=55 // pred_check
          %p2672 = pneg %p197
        $region58: #{tpu_custom_call.1} parent=55 // pred_check_branch
          %2674 = sbr.rel (%p2672) target = $region60
        $region59: #{tpu_custom_call.1} parent=55 // pred_region
          %s2675 = sand.u32 %s182, 1
          %s2676 = scalar_lea.sflag [#allocation3], %s2675
          %s2677 = sand.u32 %s182, 1
          %s2678 = smul.addr %s2677, 512
          %s2679 = scalar_lea.vmem [#allocation2], %s2678
          %2680 = dma.done %s2676, 8192
        $region60: #{tpu_custom_call.1} parent=55 // pred_fallthru
          _
      $region56: #{tpu_custom_call.1} parent=5 // pred_fallthru
        _
    $region6: #{tpu_custom_call.1} parent=1 // loop_footer
      %s20 = sadd.s32 1, %s16
    $region7: #{tpu_custom_call.1} parent=1 // loop_footer_branch
      %15 = sbr.rel target = $region3
    $region8: #{tpu_custom_call.1} parent=1 // loop_exit
      _
    %2681 = vsyncpa [#allocation3], 1
    %s2682 = scalar_lea.sflag [#allocation3], 1
    %2683 = vsyncpa %s2682, 1

</llo_original>
